<compile_context>
chip_gen: v7x
topology: tpu7x:2x2x1
jax: 0.10.0
libtpu: 0.0.40
codegen_flags: <defaults>
</compile_context>

<pallas_src>
import functools

import jax
import jax.numpy as jnp
from jax.experimental import pallas as pl
from jax.experimental.pallas import tpu as pltpu


def _round_up(x, m):
    return ((x + m - 1) // m) * m


# --------------------------------------------------------------------------
# Fused kernel: in-kernel im2col -> conv matmul -> BN shift -> ReLU -> maxpool
# --------------------------------------------------------------------------
def _stem_fused_kernel(x_ref, w_ref, shift_ref, out_ref, rbuf_ref, *,
                       TP, Ho, Wo, Wp, WC, Cin):
    # x_ref    : (1, Hs2d, Ws2d, 4*Cin) bf16  space-to-depth(2x2) padded input
    # w_ref    : (64*Cin, Cout)         bf16  conv weights (BN scale folded)
    # shift_ref: (1, Cout)              f32   BN shift
    # out_ref  : (1, TP, Wp, Cout)      f32   pooled rows of this tile
    # rbuf_ref : (CH, WC, Cout)         f32   conv-row scratch (pool-padded)
    CH = 2 * TP + 2                     # conv rows computed per tile
    t = pl.program_id(1)
    row0 = t * (2 * TP)

    # ---- in-kernel im2col: 16 unit-stride slices of the s2d input ----
    # Tap (ih, iw) holds the 2x2 sub-taps kh = 2*ih + a, kw = 2*iw + b packed
    # in its 4*Cin channels; weights for kh/kw >= 7 are zero.
    taps = []
    for ih in range(4):
        for iw in range(4):
            taps.append(x_ref[0, pl.ds(row0 + ih, CH), pl.ds(iw, WC), :])
    patches = jnp.concatenate(taps, axis=-1)                # (CH, WC, 64*Cin)
    patches = patches.reshape(CH * WC, 16 * 4 * Cin)

    # ---- conv (MXU, f32 accumulate) + folded-BN shift + ReLU ----
    y = jnp.dot(patches, w_ref[...], preferred_element_type=jnp.float32)
    y = jnp.maximum(y + shift_ref[...], 0.0).reshape(CH, WC, -1)

    # ---- zero conv rows/cols that are maxpool padding or out of range ----
    # Post-ReLU data is >= 0, so 0 is equivalent to the pool's implicit -inf
    # padding; this also kills garbage rows/cols computed from zero-padded
    # input (conv row -1 / >= Ho, conv col -1 / >= Wo).
    cg = 2 * TP * t - 1 + jax.lax.broadcasted_iota(jnp.int32, (CH, 1, 1), 0)
    cw = jax.lax.broadcasted_iota(jnp.int32, (1, WC, 1), 1) - 1
    valid = (cg >= 0) & (cg < Ho) & (cw >= 0) & (cw < Wo)
    rbuf_ref[...] = jnp.where(valid, y, 0.0)

    # ---- fused 3x3 / stride-2 / pad-1 max pool ----
    # Columns: pooled col q needs buffer cols 2q, 2q+1, 2q+2 (= conv cols
    # 2q-1, 2q, 2q+1 with the left pool pad sitting at buffer col 0).
    c0 = rbuf_ref[:, pl.ds(0, Wp, stride=2), :]
    c1 = rbuf_ref[:, pl.ds(1, Wp, stride=2), :]
    c2 = rbuf_ref[:, pl.ds(2, Wp, stride=2), :]
    cm = jnp.maximum(jnp.maximum(c0, c1), c2)                # (CH, Wp, Cout)

    # Rows: pooled row p needs conv local rows 2p, 2p+1, 2p+2.
    C = cm.shape[-1]
    ev = cm[0:2 * TP].reshape(TP, 2, Wp, C)                  # rows 2p / 2p+1
    od = cm[2:2 * TP + 2].reshape(TP, 2, Wp, C)              # rows 2p+2 (od[:,1] unused)
    out_ref[0] = jnp.maximum(jnp.maximum(ev[:, 0], ev[:, 1]),
                             od[:, 0]).astype(out_ref.dtype)


# --------------------------------------------------------------------------
# Wrapper (NCHW in / NCHW out, matching the PyTorch module)
# --------------------------------------------------------------------------
def basic_stem_forward(x_nchw, conv_w, bn_gamma, bn_beta, bn_mean, bn_var,
                       eps=1e-5):
    """conv(7x7,s2,p3, no bias) -> BatchNorm(eval) -> ReLU -> maxpool(3,s2,p1)."""
    N, Cin, H, W = x_nchw.shape
    Cout, _, KH, KW = conv_w.shape
    assert (KH, KW) == (7, 7)
    Ho = (H + 2 * 3 - 7) // 2 + 1
    Wo = (W + 2 * 3 - 7) // 2 + 1
    Hp = (Ho + 2 * 1 - 3) // 2 + 1
    Wp = (Wo + 2 * 1 - 3) // 2 + 1

    # ---- pooled-row tiling: >= 2 tiles/sample (megacore), ~<= 1 MiB out/tile ----
    n_pt = max(2 if Hp >= 2 else 1, pl.cdiv(Hp * Wp * Cout * 4, 1 << 20))
    n_pt = min(n_pt, Hp)
    TP = pl.cdiv(Hp, n_pt)
    n_pt = pl.cdiv(Hp, TP)
    CH = 2 * TP + 2                      # conv rows computed per tile
    WC = _round_up(2 * Wp + 2, 8)        # conv cols computed (incl. pool pads)

    # ---- space-to-depth(2x2) of the padded input (same bytes as raw input) ----
    # xs'[r, s] = x[r-5, s-5] (conv pad 3 + 2 extra so every index is >= 0);
    # X2[i, j, (a*2+b)*Cin + c] = xs'[2i+a, 2j+b, c].
    Hs2d = 2 * TP * n_pt + 5
    Ws2d = WC + 3
    x = jnp.transpose(x_nchw, (0, 2, 3, 1)).astype(jnp.bfloat16)         # NHWC
    xp = jnp.pad(x, ((0, 0),
                     (5, 2 * Hs2d - 5 - H),
                     (5, 2 * Ws2d - 5 - W),
                     (0, 0)))
    x2 = xp.reshape(N, Hs2d, 2, Ws2d, 2, Cin)
    x2 = jnp.transpose(x2, (0, 1, 3, 2, 4, 5)).reshape(N, Hs2d, Ws2d, 4 * Cin)

    # ---- fold eval-mode BatchNorm: scale into weights, shift stays in epilogue ----
    inv_std = 1.0 / jnp.sqrt(bn_var.astype(jnp.float32) + eps)
    scale = bn_gamma.astype(jnp.float32) * inv_std
    shift = (bn_beta.astype(jnp.float32)
             - bn_mean.astype(jnp.float32) * scale).reshape(1, Cout)
    wf = jnp.transpose(conv_w, (2, 3, 1, 0)).astype(jnp.float32) * scale  # (7,7,Cin,Cout)
    wf = jnp.pad(wf, ((0, 1), (0, 1), (0, 0), (0, 0)))                    # (8,8,Cin,Cout)
    wmat = wf.reshape(4, 2, 4, 2, Cin, Cout).transpose(0, 2, 1, 3, 4, 5)  # (ih,iw,a,b,ci,co)
    wmat = wmat.reshape(16 * 4 * Cin, Cout).astype(jnp.bfloat16)

    pooled = pl.pallas_call(
        functools.partial(_stem_fused_kernel, TP=TP, Ho=Ho, Wo=Wo, Wp=Wp,
                          WC=WC, Cin=Cin),
        out_shape=jax.ShapeDtypeStruct((N, Hp, Wp, Cout), jnp.float32),
        grid=(N, n_pt),
        in_specs=[
            pl.BlockSpec((1, Hs2d, Ws2d, 4 * Cin), lambda n, t: (n, 0, 0, 0)),
            pl.BlockSpec((16 * 4 * Cin, Cout), lambda n, t: (0, 0)),
            pl.BlockSpec((1, Cout), lambda n, t: (0, 0)),
        ],
        out_specs=pl.BlockSpec((1, TP, Wp, Cout), lambda n, t: (n, t, 0, 0)),
        scratch_shapes=[pltpu.VMEM((CH, WC, Cout), jnp.float32)],
        compiler_params=pltpu.CompilerParams(
            dimension_semantics=("parallel", "parallel"),
            vmem_limit_bytes=32 * 1024 * 1024),
    )(x2, wmat, shift)

    # TODO(synk): caffe_maxpool=True branch (3x3/s2/p0, ceil_mode) not implemented
    # (module default is caffe_maxpool=False, which is what this kernel does).
    return jnp.transpose(pooled, (0, 3, 1, 2))                            # NCHW


# --------------------------------------------------------------------------
# Plain-JAX reference (for the self-check)
# --------------------------------------------------------------------------
def _reference(x, w, gamma, beta, mean, var, eps=1e-5):
    y = jax.lax.conv_general_dilated(
        x, w, window_strides=(2, 2), padding=((3, 3), (3, 3)),
        dimension_numbers=("NCHW", "OIHW", "NCHW"))
    scale = gamma / jnp.sqrt(var + eps)
    shift = beta - mean * scale
    y = y * scale[None, :, None, None] + shift[None, :, None, None]
    y = jnp.maximum(y, 0.0)
    y = jax.lax.reduce_window(
        y, -jnp.inf, jax.lax.max,
        window_dimensions=(1, 1, 3, 3), window_strides=(1, 1, 2, 2),
        padding=((0, 0), (0, 0), (1, 1), (1, 1)))
    return y


if __name__ == "__main__":
    key = jax.random.PRNGKey(0)
    k1, k2, k3, k4, k5, k6 = jax.random.split(key, 6)

    # Module defaults: in_channels=3, out_channels=64, norm='BN', caffe_maxpool=False
    N, Cin, H, W = 2, 3, 16, 16
    Cout, KH, KW = 64, 7, 7

    x = jax.random.normal(k1, (N, Cin, H, W), jnp.float32)
    conv_w = jax.random.normal(k2, (Cout, Cin, KH, KW), jnp.float32) * 0.05
    bn_gamma = jax.random.uniform(k3, (Cout,), jnp.float32, 0.5, 1.5)
    bn_beta = jax.random.normal(k4, (Cout,), jnp.float32) * 0.1
    bn_mean = jax.random.normal(k5, (Cout,), jnp.float32) * 0.1
    bn_var = jax.random.uniform(k6, (Cout,), jnp.float32, 0.5, 1.5)

    out = jax.jit(basic_stem_forward)(x, conv_w, bn_gamma, bn_beta, bn_mean, bn_var)
    out = jax.block_until_ready(out)
    assert out.shape == (N, Cout, 4, 4), out.shape

    ref = _reference(x, conv_w, bn_gamma, bn_beta, bn_mean, bn_var)
    max_err = float(jnp.max(jnp.abs(out - ref)))
    # bf16 matmul operands (f32 accumulation) -> slightly looser tolerance
    assert max_err < 1e-1, f"max abs err {max_err}"

    print("KERNEL_OK")
</pallas_src>

<mosaic_0001>
module attributes {stable_mosaic.version = 11 : i64} {
  func.func @_stem_fused_kernel(%arg0: i32, %arg1: i32, %arg2: memref<1x13x19x12xbf16, #tpu.memory_space<vmem>>, %arg3: memref<192x64xbf16, #tpu.memory_space<vmem>>, %arg4: memref<1x64xf32, #tpu.memory_space<vmem>>, %arg5: memref<1x2x4x64xf32, #tpu.memory_space<vmem>>, %arg6: memref<6x16x64xf32, #tpu.memory_space<vmem>>) attributes {dimension_semantics = [#tpu.dimension_semantics<parallel>, #tpu.dimension_semantics<parallel>], iteration_bounds = array<i64: 2, 2>, scalar_prefetch = 0 : i64, scratch_operands = 1 : i64, tpu.core_type = #tpu.core_type<tc>, window_params = [{transform_indices = @transform_0, window_bounds = array<i64: 1, 13, 19, 12>}, {pipeline_mode = #tpu.pipeline_mode<synchronous>, transform_indices = @transform_1, window_bounds = array<i64: 192, 64>}, {pipeline_mode = #tpu.pipeline_mode<synchronous>, transform_indices = @transform_2, window_bounds = array<i64: 1, 64>}, {transform_indices = @transform_3, window_bounds = array<i64: 1, 2, 4, 64>}]} {
    %c4_i32 = arith.constant 4 : i32
    %0 = arith.muli %arg1, %c4_i32 : i32
    %c0_i32 = arith.constant 0 : i32
    %1 = arith.addi %0, %c0_i32 : i32
    %c0 = arith.constant 0 : index
    %2 = arith.index_cast %1 : i32 to index
    %c0_0 = arith.constant 0 : index
    %c0_1 = arith.constant 0 : index
    %3 = vector.load %arg2[%c0, %2, %c0_0, %c0_1] : memref<1x13x19x12xbf16, #tpu.memory_space<vmem>>, vector<1x6x16x12xbf16>
    %4 = vector.shape_cast %3 : vector<1x6x16x12xbf16> to vector<6x16x12xbf16>
    %c0_i32_2 = arith.constant 0 : i32
    %5 = arith.addi %0, %c0_i32_2 : i32
    %c0_3 = arith.constant 0 : index
    %6 = arith.index_cast %5 : i32 to index
    %c1 = arith.constant 1 : index
    %c0_4 = arith.constant 0 : index
    %7 = vector.load %arg2[%c0_3, %6, %c1, %c0_4] : memref<1x13x19x12xbf16, #tpu.memory_space<vmem>>, vector<1x6x16x12xbf16>
    %8 = vector.shape_cast %7 : vector<1x6x16x12xbf16> to vector<6x16x12xbf16>
    %c0_i32_5 = arith.constant 0 : i32
    %9 = arith.addi %0, %c0_i32_5 : i32
    %c0_6 = arith.constant 0 : index
    %10 = arith.index_cast %9 : i32 to index
    %c2 = arith.constant 2 : index
    %c0_7 = arith.constant 0 : index
    %11 = vector.load %arg2[%c0_6, %10, %c2, %c0_7] : memref<1x13x19x12xbf16, #tpu.memory_space<vmem>>, vector<1x6x16x12xbf16>
    %12 = vector.shape_cast %11 : vector<1x6x16x12xbf16> to vector<6x16x12xbf16>
    %c0_i32_8 = arith.constant 0 : i32
    %13 = arith.addi %0, %c0_i32_8 : i32
    %c0_9 = arith.constant 0 : index
    %14 = arith.index_cast %13 : i32 to index
    %c3 = arith.constant 3 : index
    %c0_10 = arith.constant 0 : index
    %15 = vector.load %arg2[%c0_9, %14, %c3, %c0_10] : memref<1x13x19x12xbf16, #tpu.memory_space<vmem>>, vector<1x6x16x12xbf16>
    %16 = vector.shape_cast %15 : vector<1x6x16x12xbf16> to vector<6x16x12xbf16>
    %c1_i32 = arith.constant 1 : i32
    %17 = arith.addi %0, %c1_i32 : i32
    %c0_11 = arith.constant 0 : index
    %18 = arith.index_cast %17 : i32 to index
    %c0_12 = arith.constant 0 : index
    %c0_13 = arith.constant 0 : index
    %19 = vector.load %arg2[%c0_11, %18, %c0_12, %c0_13] : memref<1x13x19x12xbf16, #tpu.memory_space<vmem>>, vector<1x6x16x12xbf16>
    %20 = vector.shape_cast %19 : vector<1x6x16x12xbf16> to vector<6x16x12xbf16>
    %c1_i32_14 = arith.constant 1 : i32
    %21 = arith.addi %0, %c1_i32_14 : i32
    %c0_15 = arith.constant 0 : index
    %22 = arith.index_cast %21 : i32 to index
    %c1_16 = arith.constant 1 : index
    %c0_17 = arith.constant 0 : index
    %23 = vector.load %arg2[%c0_15, %22, %c1_16, %c0_17] : memref<1x13x19x12xbf16, #tpu.memory_space<vmem>>, vector<1x6x16x12xbf16>
    %24 = vector.shape_cast %23 : vector<1x6x16x12xbf16> to vector<6x16x12xbf16>
    %c1_i32_18 = arith.constant 1 : i32
    %25 = arith.addi %0, %c1_i32_18 : i32
    %c0_19 = arith.constant 0 : index
    %26 = arith.index_cast %25 : i32 to index
    %c2_20 = arith.constant 2 : index
    %c0_21 = arith.constant 0 : index
    %27 = vector.load %arg2[%c0_19, %26, %c2_20, %c0_21] : memref<1x13x19x12xbf16, #tpu.memory_space<vmem>>, vector<1x6x16x12xbf16>
    %28 = vector.shape_cast %27 : vector<1x6x16x12xbf16> to vector<6x16x12xbf16>
    %c1_i32_22 = arith.constant 1 : i32
    %29 = arith.addi %0, %c1_i32_22 : i32
    %c0_23 = arith.constant 0 : index
    %30 = arith.index_cast %29 : i32 to index
    %c3_24 = arith.constant 3 : index
    %c0_25 = arith.constant 0 : index
    %31 = vector.load %arg2[%c0_23, %30, %c3_24, %c0_25] : memref<1x13x19x12xbf16, #tpu.memory_space<vmem>>, vector<1x6x16x12xbf16>
    %32 = vector.shape_cast %31 : vector<1x6x16x12xbf16> to vector<6x16x12xbf16>
    %c2_i32 = arith.constant 2 : i32
    %33 = arith.addi %0, %c2_i32 : i32
    %c0_26 = arith.constant 0 : index
    %34 = arith.index_cast %33 : i32 to index
    %c0_27 = arith.constant 0 : index
    %c0_28 = arith.constant 0 : index
    %35 = vector.load %arg2[%c0_26, %34, %c0_27, %c0_28] : memref<1x13x19x12xbf16, #tpu.memory_space<vmem>>, vector<1x6x16x12xbf16>
    %36 = vector.shape_cast %35 : vector<1x6x16x12xbf16> to vector<6x16x12xbf16>
    %c2_i32_29 = arith.constant 2 : i32
    %37 = arith.addi %0, %c2_i32_29 : i32
    %c0_30 = arith.constant 0 : index
    %38 = arith.index_cast %37 : i32 to index
    %c1_31 = arith.constant 1 : index
    %c0_32 = arith.constant 0 : index
    %39 = vector.load %arg2[%c0_30, %38, %c1_31, %c0_32] : memref<1x13x19x12xbf16, #tpu.memory_space<vmem>>, vector<1x6x16x12xbf16>
    %40 = vector.shape_cast %39 : vector<1x6x16x12xbf16> to vector<6x16x12xbf16>
    %c2_i32_33 = arith.constant 2 : i32
    %41 = arith.addi %0, %c2_i32_33 : i32
    %c0_34 = arith.constant 0 : index
    %42 = arith.index_cast %41 : i32 to index
    %c2_35 = arith.constant 2 : index
    %c0_36 = arith.constant 0 : index
    %43 = vector.load %arg2[%c0_34, %42, %c2_35, %c0_36] : memref<1x13x19x12xbf16, #tpu.memory_space<vmem>>, vector<1x6x16x12xbf16>
    %44 = vector.shape_cast %43 : vector<1x6x16x12xbf16> to vector<6x16x12xbf16>
    %c2_i32_37 = arith.constant 2 : i32
    %45 = arith.addi %0, %c2_i32_37 : i32
    %c0_38 = arith.constant 0 : index
    %46 = arith.index_cast %45 : i32 to index
    %c3_39 = arith.constant 3 : index
    %c0_40 = arith.constant 0 : index
    %47 = vector.load %arg2[%c0_38, %46, %c3_39, %c0_40] : memref<1x13x19x12xbf16, #tpu.memory_space<vmem>>, vector<1x6x16x12xbf16>
    %48 = vector.shape_cast %47 : vector<1x6x16x12xbf16> to vector<6x16x12xbf16>
    %c3_i32 = arith.constant 3 : i32
    %49 = arith.addi %0, %c3_i32 : i32
    %c0_41 = arith.constant 0 : index
    %50 = arith.index_cast %49 : i32 to index
    %c0_42 = arith.constant 0 : index
    %c0_43 = arith.constant 0 : index
    %51 = vector.load %arg2[%c0_41, %50, %c0_42, %c0_43] : memref<1x13x19x12xbf16, #tpu.memory_space<vmem>>, vector<1x6x16x12xbf16>
    %52 = vector.shape_cast %51 : vector<1x6x16x12xbf16> to vector<6x16x12xbf16>
    %c3_i32_44 = arith.constant 3 : i32
    %53 = arith.addi %0, %c3_i32_44 : i32
    %c0_45 = arith.constant 0 : index
    %54 = arith.index_cast %53 : i32 to index
    %c1_46 = arith.constant 1 : index
    %c0_47 = arith.constant 0 : index
    %55 = vector.load %arg2[%c0_45, %54, %c1_46, %c0_47] : memref<1x13x19x12xbf16, #tpu.memory_space<vmem>>, vector<1x6x16x12xbf16>
    %56 = vector.shape_cast %55 : vector<1x6x16x12xbf16> to vector<6x16x12xbf16>
    %c3_i32_48 = arith.constant 3 : i32
    %57 = arith.addi %0, %c3_i32_48 : i32
    %c0_49 = arith.constant 0 : index
    %58 = arith.index_cast %57 : i32 to index
    %c2_50 = arith.constant 2 : index
    %c0_51 = arith.constant 0 : index
    %59 = vector.load %arg2[%c0_49, %58, %c2_50, %c0_51] : memref<1x13x19x12xbf16, #tpu.memory_space<vmem>>, vector<1x6x16x12xbf16>
    %60 = vector.shape_cast %59 : vector<1x6x16x12xbf16> to vector<6x16x12xbf16>
    %c3_i32_52 = arith.constant 3 : i32
    %61 = arith.addi %0, %c3_i32_52 : i32
    %c0_53 = arith.constant 0 : index
    %62 = arith.index_cast %61 : i32 to index
    %c3_54 = arith.constant 3 : index
    %c0_55 = arith.constant 0 : index
    %63 = vector.load %arg2[%c0_53, %62, %c3_54, %c0_55] : memref<1x13x19x12xbf16, #tpu.memory_space<vmem>>, vector<1x6x16x12xbf16>
    %64 = vector.shape_cast %63 : vector<1x6x16x12xbf16> to vector<6x16x12xbf16>
    %65 = tpu.concatenate %4, %8, %12, %16, %20, %24, %28, %32, %36, %40, %44, %48, %52, %56, %60, %64 in 2 : vector<6x16x12xbf16>, vector<6x16x12xbf16>, vector<6x16x12xbf16>, vector<6x16x12xbf16>, vector<6x16x12xbf16>, vector<6x16x12xbf16>, vector<6x16x12xbf16>, vector<6x16x12xbf16>, vector<6x16x12xbf16>, vector<6x16x12xbf16>, vector<6x16x12xbf16>, vector<6x16x12xbf16>, vector<6x16x12xbf16>, vector<6x16x12xbf16>, vector<6x16x12xbf16>, vector<6x16x12xbf16> -> vector<6x16x192xbf16>
    %66 = vector.shape_cast %65 : vector<6x16x192xbf16> to vector<96x192xbf16>
    %c0_56 = arith.constant 0 : index
    %c0_57 = arith.constant 0 : index
    %67 = vector.load %arg3[%c0_56, %c0_57] : memref<192x64xbf16, #tpu.memory_space<vmem>>, vector<192x64xbf16>
    %cst = arith.constant dense<0.000000e+00> : vector<96x64xf32>
    %68 = tpu.matmul %66, %67, %cst {dimension_numbers = #tpu.dot_dimension_numbers<[1], [0], [0], [1], [0, 0, 1, 1], [], []>} : vector<96x192xbf16>, vector<192x64xbf16>, vector<96x64xf32> -> vector<96x64xf32>
    %c0_58 = arith.constant 0 : index
    %c0_59 = arith.constant 0 : index
    %69 = vector.load %arg4[%c0_58, %c0_59] : memref<1x64xf32, #tpu.memory_space<vmem>>, vector<1x64xf32>
    %70 = vector.broadcast %69 : vector<1x64xf32> to vector<96x64xf32>
    %71 = arith.addf %68, %70 : vector<96x64xf32>
    %cst_60 = arith.constant 0.000000e+00 : f32
    %72 = vector.broadcast %cst_60 : f32 to vector<96x64xf32>
    %73 = arith.maximumf %71, %72 : vector<96x64xf32>
    %74 = vector.shape_cast %73 : vector<96x64xf32> to vector<6x16x64xf32>
    %c4_i32_61 = arith.constant 4 : i32
    %75 = arith.muli %c4_i32_61, %arg1 : i32
    %c1_i32_62 = arith.constant 1 : i32
    %76 = arith.subi %75, %c1_i32_62 : i32
    %77 = tpu.iota {dimensions = array<i32: 0>} : vector<6x1x1xi32>
    %78 = vector.broadcast %76 : i32 to vector<6x1x1xi32>
    %79 = arith.addi %78, %77 : vector<6x1x1xi32>
    %80 = tpu.iota {dimensions = array<i32: 1>} : vector<1x16x1xi32>
    %c1_i32_63 = arith.constant 1 : i32
    %81 = vector.broadcast %c1_i32_63 : i32 to vector<1x16x1xi32>
    %82 = arith.subi %80, %81 : vector<1x16x1xi32>
    %c0_i32_64 = arith.constant 0 : i32
    %83 = vector.broadcast %c0_i32_64 : i32 to vector<6x1x1xi32>
    %84 = arith.cmpi sge, %79, %83 : vector<6x1x1xi32>
    %c8_i32 = arith.constant 8 : i32
    %85 = vector.broadcast %c8_i32 : i32 to vector<6x1x1xi32>
    %86 = arith.cmpi slt, %79, %85 : vector<6x1x1xi32>
    %87 = arith.andi %84, %86 : vector<6x1x1xi1>
    %c0_i32_65 = arith.constant 0 : i32
    %88 = vector.broadcast %c0_i32_65 : i32 to vector<1x16x1xi32>
    %89 = arith.cmpi sge, %82, %88 : vector<1x16x1xi32>
    %90 = vector.broadcast %87 : vector<6x1x1xi1> to vector<6x16x1xi1>
    %91 = vector.broadcast %89 : vector<1x16x1xi1> to vector<6x16x1xi1>
    %92 = arith.andi %90, %91 : vector<6x16x1xi1>
    %c8_i32_66 = arith.constant 8 : i32
    %93 = vector.broadcast %c8_i32_66 : i32 to vector<1x16x1xi32>
    %94 = arith.cmpi slt, %82, %93 : vector<1x16x1xi32>
    %95 = vector.broadcast %94 : vector<1x16x1xi1> to vector<6x16x1xi1>
    %96 = arith.andi %92, %95 : vector<6x16x1xi1>
    %cst_67 = arith.constant 0.000000e+00 : f32
    %97 = vector.shape_cast %96 : vector<6x16x1xi1> to vector<6x16x1xi1>
    %98 = vector.broadcast %97 : vector<6x16x1xi1> to vector<6x16x64xi1>
    %99 = vector.broadcast %cst_67 : f32 to vector<6x16x64xf32>
    %100 = arith.select %98, %74, %99 : vector<6x16x64xi1>, vector<6x16x64xf32>
    %c0_68 = arith.constant 0 : index
    %c0_69 = arith.constant 0 : index
    %c0_70 = arith.constant 0 : index
    %101 = vector.load %arg6[%c0_68, %c0_69, %c0_70] : memref<6x16x64xf32, #tpu.memory_space<vmem>>, vector<6x16x64xf32>
    tpu.vector_store %arg6[%c0_68, %c0_69, %c0_70], %100 {strides = array<i32>} : memref<6x16x64xf32, #tpu.memory_space<vmem>>, vector<6x16x64xf32>,
    %c0_71 = arith.constant 0 : index
    %c0_72 = arith.constant 0 : index
    %c0_73 = arith.constant 0 : index
    %102 = tpu.strided_load %arg6[%c0_71, %c0_72, %c0_73] {strides = array<i32: 1, 2, 1>} : memref<6x16x64xf32, #tpu.memory_space<vmem>>, vector<6x4x64xf32>
    %c0_74 = arith.constant 0 : index
    %c1_75 = arith.constant 1 : index
    %c0_76 = arith.constant 0 : index
    %103 = tpu.strided_load %arg6[%c0_74, %c1_75, %c0_76] {strides = array<i32: 1, 2, 1>} : memref<6x16x64xf32, #tpu.memory_space<vmem>>, vector<6x4x64xf32>
    %c0_77 = arith.constant 0 : index
    %c2_78 = arith.constant 2 : index
    %c0_79 = arith.constant 0 : index
    %104 = tpu.strided_load %arg6[%c0_77, %c2_78, %c0_79] {strides = array<i32: 1, 2, 1>} : memref<6x16x64xf32, #tpu.memory_space<vmem>>, vector<6x4x64xf32>
    %105 = arith.maximumf %102, %103 : vector<6x4x64xf32>
    %106 = arith.maximumf %105, %104 : vector<6x4x64xf32>
    %107 = vector.extract_strided_slice %106 {offsets = [0, 0, 0], sizes = [4, 4, 64], strides = [1, 1, 1]} : vector<6x4x64xf32> to vector<4x4x64xf32>
    %108 = vector.shape_cast %107 : vector<4x4x64xf32> to vector<2x2x4x64xf32>
    %109 = vector.extract_strided_slice %106 {offsets = [2, 0, 0], sizes = [4, 4, 64], strides = [1, 1, 1]} : vector<6x4x64xf32> to vector<4x4x64xf32>
    %110 = vector.shape_cast %109 : vector<4x4x64xf32> to vector<2x2x4x64xf32>
    %111 = vector.extract_strided_slice %108 {offsets = [0, 0, 0, 0], sizes = [2, 1, 4, 64], strides = [1, 1, 1, 1]} : vector<2x2x4x64xf32> to vector<2x1x4x64xf32>
    %112 = vector.shape_cast %111 : vector<2x1x4x64xf32> to vector<2x4x64xf32>
    %113 = vector.extract_strided_slice %108 {offsets = [0, 1, 0, 0], sizes = [2, 1, 4, 64], strides = [1, 1, 1, 1]} : vector<2x2x4x64xf32> to vector<2x1x4x64xf32>
    %114 = vector.shape_cast %113 : vector<2x1x4x64xf32> to vector<2x4x64xf32>
    %115 = arith.maximumf %112, %114 : vector<2x4x64xf32>
    %116 = vector.extract_strided_slice %110 {offsets = [0, 0, 0, 0], sizes = [2, 1, 4, 64], strides = [1, 1, 1, 1]} : vector<2x2x4x64xf32> to vector<2x1x4x64xf32>
    %117 = vector.shape_cast %116 : vector<2x1x4x64xf32> to vector<2x4x64xf32>
    %118 = arith.maximumf %115, %117 : vector<2x4x64xf32>
    %c0_80 = arith.constant 0 : index
    %c0_81 = arith.constant 0 : index
    %c0_82 = arith.constant 0 : index
    %c0_83 = arith.constant 0 : index
    %119 = vector.load %arg5[%c0_80, %c0_81, %c0_82, %c0_83] : memref<1x2x4x64xf32, #tpu.memory_space<vmem>>, vector<1x2x4x64xf32>
    %120 = vector.shape_cast %119 : vector<1x2x4x64xf32> to vector<2x4x64xf32>
    %121 = vector.shape_cast %118 : vector<2x4x64xf32> to vector<1x2x4x64xf32>
    tpu.vector_store %arg5[%c0_80, %c0_81, %c0_82, %c0_83], %121 {strides = array<i32>} : memref<1x2x4x64xf32, #tpu.memory_space<vmem>>, vector<1x2x4x64xf32>,
    return
  }
  func.func @transform_0(%arg0: i32, %arg1: i32) -> (i32, i32, i32, i32) {
    %c0_i32 = arith.constant 0 : i32
    %c0_i32_0 = arith.constant 0 : i32
    %c0_i32_1 = arith.constant 0 : i32
    %c0_i32_2 = arith.constant 0 : i32
    return %arg0, %c0_i32, %c0_i32_0, %c0_i32_1 : i32, i32, i32, i32
  }
  func.func @transform_1(%arg0: i32, %arg1: i32) -> (i32, i32) {
    %c0_i32 = arith.constant 0 : i32
    %c0_i32_0 = arith.constant 0 : i32
    %c0_i32_1 = arith.constant 0 : i32
    return %c0_i32, %c0_i32_0 : i32, i32
  }
  func.func @transform_2(%arg0: i32, %arg1: i32) -> (i32, i32) {
    %c0_i32 = arith.constant 0 : i32
    %c0_i32_0 = arith.constant 0 : i32
    %c0_i32_1 = arith.constant 0 : i32
    return %c0_i32, %c0_i32_0 : i32, i32
  }
  func.func @transform_3(%arg0: i32, %arg1: i32) -> (i32, i32, i32, i32) {
    %c0_i32 = arith.constant 0 : i32
    %c0_i32_0 = arith.constant 0 : i32
    %c0_i32_1 = arith.constant 0 : i32
    return %arg0, %arg1, %c0_i32, %c0_i32_0 : i32, i32, i32, i32
  }
}

</mosaic_0001>

<llo_original>
// kernel: basic_stem_forward.1
$region0: #{basic_stem_forward.1}
  #allocation0 [shape = 'u32[]', space=smem, size = 0x4, offset = 0x4, fixed_abs, tag = 'smem constant byte address 0x4 - core index']
  #allocation1 [shape = 'u32[144,128]{1,0:T(1,128)}', space=vmem, size = 0x12000, scoped, tag = 'internal scratch']
  #allocation2 [shape = 'f32[6,16,64]{2,1,0:T(8,128)}', space=vmem, size = 0xc000, scoped, tag = 'scratch operand']
  %s0 = inlined_call_operand.vmem [shape: bf16[2,13,19,12], index: 0, kind: input, shape index: {}]
  %s1 = inlined_call_operand.vmem [shape: bf16[192,64], index: 1, kind: input, shape index: {}]
  %s2 = inlined_call_operand.vmem [shape: f32[1,64], index: 2, kind: input, shape index: {}]
  %s3 = inlined_call_operand.hbm [shape: f32[2,4,4,64], index: 3, kind: output, shape index: {}]
  %s4 = sld [smem:[#allocation0]]
  $region45: #{basic_stem_forward.1} parent=0
    _
  %s6 = ssub.s32 1, %s4
  %s7 = scalar_select 0, %s6, %s4
  $region1: #{basic_stem_forward.1} parent=0
    #allocation3 [shape = 'u8[8192]{0}', space=vmem, size = 0x2000, scoped, tag = 'output window, operand 0']
    #allocation4 [shape = 's32[2]{0}', space=sflag, size = 0x8, scoped, tag = 'scoped memory for basic_stem_forward.1']
    %8 = vsyncpa [#allocation4], 0
    %s9 = scalar_lea.sflag [#allocation4], 1
    %10 = vsyncpa %s9, 0
    loop: start=0, step=1, limit=6
    $region2: #{basic_stem_forward.1} parent=1 // loop_pre_header
      _
    $region3: #{basic_stem_forward.1} parent=1 // loop_header
      %s12 = sphi 0, %s16
      %p13 = scmp.ge.s32.totalorder %s12, 6
      %s19 = sphi 0, %s31
      %s20 = sphi 0, %s27
      %s21 = sphi 0, %s19
      %s22 = sphi 0, %s20
      %s23 = sphi 0, %s21
      %s24 = sphi 0, %s22
      %s34 = sphi 0, %s36
      %s37 = sphi 0, %s34
      %s38 = sphi 0, %s37
      %s54 = sphi 0, %s38
      %s58 = sphi 0, %s58
      %s60 = sphi 0, %s58
      %s61 = sphi 0, %s60
      %s75 = sphi 0, %s61
      %s79 = sphi 0, %s79
      %s81 = sphi 0, %s79
      %s82 = sphi 0, %s81
      %s96 = sphi 0, %s82
      %s104 = sphi 0, %s106
      %s107 = sphi 0, %s104
      %s108 = sphi 0, %s107
      %s124 = sphi 0, %s108
    $region4: #{basic_stem_forward.1} parent=1 // loop_header_branch
      %15 = sbr.rel (%p13) target = $region8
    $region5: #{basic_stem_forward.1} parent=1 // loop_body
      %s17 = ssub.s32 %s12, 1
      %s18 = ssub.s32 %s12, 2
      %s25 = sadd.s32 1, %s20
      %p26 = scmp.ge.s32.totalorder %s25, 2
      %s27 = scalar_select %p26, 0, %s25
      %s28 = sadd.s32 1, %s19
      %s29 = scalar_select %p26, %s28, %s19
      %p30 = scmp.ge.s32.totalorder %s29, 2
      %s31 = scalar_select %p30, 0, %s29
      %s32 = ssub.s32 %s19, %s31
      %p33 = scmp.eq.s32.totalorder %s32, 0
      %s35 = sadd.s32 %s34, 1
      %s36 = scalar_select %p33, %s34, %s35
      %p39 = pneg %p33
      %p40 = scmp.eq.s32.totalorder %s12, 3
      %p41 = por %p39, %p40
      %p42 = scmp.ne.s32.totalorder %s34, %s37
      %p43 = scmp.eq.s32.totalorder %s12, 0
      %p44 = por %p42, %p43
      %p45 = scmp.ne.s32.totalorder %s34, %s37
      %p46 = scmp.eq.s32.totalorder %s17, 3
      %p47 = por %p45, %p46
      %p48 = scmp.ne.s32.totalorder %s37, %s38
      %p49 = scmp.eq.s32.totalorder %s17, 0
      %p50 = por %p48, %p49
      %p51 = scmp.ne.s32.totalorder %s37, %s38
      %p52 = scmp.eq.s32.totalorder %s18, 3
      %p53 = por %p51, %p52
      %p55 = scmp.ne.s32.totalorder %s38, %s54
      %p56 = scmp.eq.s32.totalorder %s18, 0
      %p57 = por %p55, %p56
      %s59 = sadd.s32 %s58, 1
      %p62 = scmp.eq.s32.totalorder %s12, 3
      %p63 = scmp.ne.s32.totalorder %s58, %s60
      %p64 = scmp.eq.s32.totalorder %s12, 0
      %p65 = por %p63, %p64
      %p66 = scmp.ne.s32.totalorder %s58, %s60
      %p67 = scmp.eq.s32.totalorder %s17, 3
      %p68 = por %p66, %p67
      %p69 = scmp.ne.s32.totalorder %s60, %s61
      %p70 = scmp.eq.s32.totalorder %s17, 0
      %p71 = por %p69, %p70
      %p72 = scmp.ne.s32.totalorder %s60, %s61
      %p73 = scmp.eq.s32.totalorder %s18, 3
      %p74 = por %p72, %p73
      %p76 = scmp.ne.s32.totalorder %s61, %s75
      %p77 = scmp.eq.s32.totalorder %s18, 0
      %p78 = por %p76, %p77
      %s80 = sadd.s32 %s79, 1
      %p83 = scmp.eq.s32.totalorder %s12, 3
      %p84 = scmp.ne.s32.totalorder %s79, %s81
      %p85 = scmp.eq.s32.totalorder %s12, 0
      %p86 = por %p84, %p85
      %p87 = scmp.ne.s32.totalorder %s79, %s81
      %p88 = scmp.eq.s32.totalorder %s17, 3
      %p89 = por %p87, %p88
      %p90 = scmp.ne.s32.totalorder %s81, %s82
      %p91 = scmp.eq.s32.totalorder %s17, 0
      %p92 = por %p90, %p91
      %p93 = scmp.ne.s32.totalorder %s81, %s82
      %p94 = scmp.eq.s32.totalorder %s18, 3
      %p95 = por %p93, %p94
      %p97 = scmp.ne.s32.totalorder %s82, %s96
      %p98 = scmp.eq.s32.totalorder %s18, 0
      %p99 = por %p97, %p98
      %s100 = ssub.s32 %s19, %s31
      %s101 = ssub.s32 %s20, %s27
      %s102 = sor.u32 %s100, %s101
      %p103 = scmp.eq.s32.totalorder %s102, 0
      %s105 = sadd.s32 %s104, 1
      %s106 = scalar_select %p103, %s104, %s105
      %p109 = pneg %p103
      %p110 = scmp.eq.s32.totalorder %s12, 3
      %p111 = por %p109, %p110
      %p112 = scmp.ne.s32.totalorder %s104, %s107
      %p113 = scmp.eq.s32.totalorder %s12, 0
      %p114 = por %p112, %p113
      %p115 = scmp.ne.s32.totalorder %s104, %s107
      %p116 = scmp.eq.s32.totalorder %s17, 3
      %p117 = por %p115, %p116
      %p118 = scmp.ne.s32.totalorder %s107, %s108
      %p119 = scmp.eq.s32.totalorder %s17, 0
      %p120 = por %p118, %p119
      %p121 = scmp.ne.s32.totalorder %s107, %s108
      %p122 = scmp.eq.s32.totalorder %s18, 3
      %p123 = por %p121, %p122
      %p125 = scmp.ne.s32.totalorder %s108, %s124
      %p126 = scmp.eq.s32.totalorder %s18, 0
      %p127 = por %p125, %p126
      %p128 = scmp.le.s32.totalorder 1, %s12
      %p129 = scmp.lt.s32.totalorder %s12, 5
      %p130 = pnand %p128, %p129
      %p131 = pneg %p130
      // Predicated region
      $region9: #{basic_stem_forward.1} parent=5 // pred_check
        _
      $region10: #{basic_stem_forward.1} parent=5 // pred_check_branch
        %133 = sbr.rel (%p130) target = $region12
      $region11: #{basic_stem_forward.1} parent=5 // pred_region
        %s134 = ssub.s32 %s12, 1
        // Predicated region
        $region13: #{basic_stem_forward.1} parent=11 // pred_check
          %p135 = pneg %p71
        $region14: #{basic_stem_forward.1} parent=11 // pred_check_branch
          %137 = sbr.rel (%p135) target = $region16
        $region15: #{basic_stem_forward.1} parent=11 // pred_region
          _
        $region16: #{basic_stem_forward.1} parent=11 // pred_fallthru
          _
        // Predicated region
        $region17: #{basic_stem_forward.1} parent=11 // pred_check
          %p138 = pneg %p92
        $region18: #{basic_stem_forward.1} parent=11 // pred_check_branch
          %140 = sbr.rel (%p138) target = $region20
        $region19: #{basic_stem_forward.1} parent=11 // pred_region
          _
        $region20: #{basic_stem_forward.1} parent=11 // pred_fallthru
          _
      $region12: #{basic_stem_forward.1} parent=5 // pred_fallthru
        _
      %p141 = scmp.lt.s32.totalorder %s12, 4
      // Predicated region
      $region21: #{basic_stem_forward.1} parent=5 // pred_check
        %p142 = pneg %p141
      $region22: #{basic_stem_forward.1} parent=5 // pred_check_branch
        %144 = sbr.rel (%p142) target = $region24
      $region23: #{basic_stem_forward.1} parent=5 // pred_region
        // Predicated region
        $region25: #{basic_stem_forward.1} parent=23 // pred_check
          %p145 = pneg %p44
        $region26: #{basic_stem_forward.1} parent=23 // pred_check_branch
          %147 = sbr.rel (%p145) target = $region28
        $region27: #{basic_stem_forward.1} parent=23 // pred_region
          %p148 = scmp.lt.s32.totalorder %s19, 1
          %s149 = scalar_select %p148, %s19, 1
          %s150 = smul.addr %s149, 39
          %s151 = smul.addr %s150, 4
          %s152 = scalar_lea.vmem %s0, %s151
        $region28: #{basic_stem_forward.1} parent=23 // pred_fallthru
          _
      $region24: #{basic_stem_forward.1} parent=5 // pred_fallthru
        _
      %p153 = scmp.le.s32.totalorder 1, %s12
      %p154 = scmp.lt.s32.totalorder %s12, 5
      %p155 = pnand %p153, %p154
      %p156 = pneg %p155
      // Predicated region
      $region29: #{basic_stem_forward.1} parent=5 // pred_check
        _
      $region30: #{basic_stem_forward.1} parent=5 // pred_check_branch
        %158 = sbr.rel (%p155) target = $region32
      $region31: #{basic_stem_forward.1} parent=5 // pred_region
        %s159 = ssub.s32 %s12, 1
        %p160 = scmp.lt.s32.totalorder %s21, 1
        %s161 = scalar_select %p160, %s21, 1
        %s162 = smul.addr %s161, 39
        %s163 = smul.addr %s162, 4
        %s164 = scalar_lea.vmem %s0, %s163
        %p165 = pneg %p50
        %p166 = pneg %p47
        %p167 = pneg %p71
        %p168 = pneg %p68
        %p169 = pneg %p92
        %p170 = pneg %p89
        %p171 = pneg %p120
        %p172 = pneg %p117
        %s173 = sand.u32 %s107, 1
        %s174 = scalar_lea.sflag [#allocation4], %s173
        %s175 = sand.u32 %s107, 1
        %s176 = smul.addr %s175, 8
        %s177 = scalar_lea.vmem [#allocation3], %s176
        %p178 = scmp.lt.s32.totalorder %s21, 1
        %s179 = scalar_select %p178, %s21, 1
        %s180 = smul.addr %s179, 39
        %s181 = smul.addr %s180, 4
        %s182 = scalar_lea.vmem %s0, %s181
        %s183 = smul.u32 2, %s22
        %s185 = smul.u32 %s22, 4
        %s186 = smul.u32 %s185, 3
        %s187 = smul.addr %s186, 4
        %s188 = scalar_lea.vmem %s182, %s187
        %v189 = vld [vmem:[%s188] sm:$0xf]
        %v190 = vld [vmem:[%s188 + $0x4] sm:$0xf]
        %v191 = vld [vmem:[%s188 + $0xc] sm:$0xf]
        %v192 = vld [vmem:[%s188 + $0x10] sm:$0xf]
        %v193 = vld [vmem:[%s188 + $0x18] sm:$0xf]
        %v194 = vld [vmem:[%s188 + $0x1c] sm:$0xf]
        %v195 = vld [vmem:[%s188 + $0x24] sm:$0xf]
        %v196 = vld [vmem:[%s188 + $0x28] sm:$0xf]
        %v197 = vld [vmem:[%s188 + $0x30] sm:$0xf]
        %v198 = vld [vmem:[%s188 + $0x34] sm:$0xf]
        %v199 = vld [vmem:[%s188 + $0x3c] sm:$0xf]
        %v200 = vld [vmem:[%s188 + $0x40] sm:$0xf]
        %v201 = vld [vmem:[%s188 + $0x8] sm:$0x1]
        %v202 = vld [vmem:[%s188 + $0x14] sm:$0x1]
        %v203 = vld [vmem:[%s188 + $0x20] sm:$0x1]
        %v204 = vld [vmem:[%s188 + $0x2c] sm:$0x1]
        %v205 = vld [vmem:[%s188 + $0x38] sm:$0x1]
        %v206 = vld [vmem:[%s188 + $0x44] sm:$0x1]
        %v207 = vld [vmem:[%s188] sm:$0xe]
        %v208 = vld [vmem:[%s188 + $0xc] sm:$0xe]
        %v209 = vld [vmem:[%s188 + $0x18] sm:$0xe]
        %v210 = vld [vmem:[%s188 + $0x24] sm:$0xe]
        %v211 = vld [vmem:[%s188 + $0x30] sm:$0xe]
        %v212 = vld [vmem:[%s188 + $0x3c] sm:$0xe]
        %v213 = vld [vmem:[%s188 + $0x8] sm:$0x3]
        %v214 = vld [vmem:[%s188 + $0x14] sm:$0x3]
        %v215 = vld [vmem:[%s188 + $0x20] sm:$0x3]
        %v216 = vld [vmem:[%s188 + $0x2c] sm:$0x3]
        %v217 = vld [vmem:[%s188 + $0x38] sm:$0x3]
        %v218 = vld [vmem:[%s188 + $0x44] sm:$0x3]
        %s219 = sadd.s32 %s185, 1
        %s220 = smul.u32 %s219, 3
        %s221 = smul.addr %s220, 4
        %s222 = scalar_lea.vmem %s182, %s221
        %v223 = vld [vmem:[%s222] sm:$0xf]
        %v224 = vld [vmem:[%s222 + $0x4] sm:$0xf]
        %v225 = vld [vmem:[%s222 + $0xc] sm:$0xf]
        %v226 = vld [vmem:[%s222 + $0x10] sm:$0xf]
        %v227 = vld [vmem:[%s222 + $0x18] sm:$0xf]
        %v228 = vld [vmem:[%s222 + $0x1c] sm:$0xf]
        %v229 = vld [vmem:[%s222 + $0x24] sm:$0xf]
        %v230 = vld [vmem:[%s222 + $0x28] sm:$0xf]
        %v231 = vld [vmem:[%s222 + $0x30] sm:$0xf]
        %v232 = vld [vmem:[%s222 + $0x34] sm:$0xf]
        %v233 = vld [vmem:[%s222 + $0x3c] sm:$0xf]
        %v234 = vld [vmem:[%s222 + $0x40] sm:$0xf]
        %v235 = vld [vmem:[%s222 + $0x8] sm:$0x1]
        %v236 = vld [vmem:[%s222 + $0x14] sm:$0x1]
        %v237 = vld [vmem:[%s222 + $0x20] sm:$0x1]
        %v238 = vld [vmem:[%s222 + $0x2c] sm:$0x1]
        %v239 = vld [vmem:[%s222 + $0x38] sm:$0x1]
        %v240 = vld [vmem:[%s222 + $0x44] sm:$0x1]
        %v241 = vld [vmem:[%s222] sm:$0xe]
        %v242 = vld [vmem:[%s222 + $0xc] sm:$0xe]
        %v243 = vld [vmem:[%s222 + $0x18] sm:$0xe]
        %v244 = vld [vmem:[%s222 + $0x24] sm:$0xe]
        %v245 = vld [vmem:[%s222 + $0x30] sm:$0xe]
        %v246 = vld [vmem:[%s222 + $0x3c] sm:$0xe]
        %v247 = vld [vmem:[%s222 + $0x8] sm:$0x3]
        %v248 = vld [vmem:[%s222 + $0x14] sm:$0x3]
        %v249 = vld [vmem:[%s222 + $0x20] sm:$0x3]
        %v250 = vld [vmem:[%s222 + $0x2c] sm:$0x3]
        %v251 = vld [vmem:[%s222 + $0x38] sm:$0x3]
        %v252 = vld [vmem:[%s222 + $0x44] sm:$0x3]
        %s253 = sadd.s32 %s185, 2
        %s254 = smul.u32 %s253, 3
        %s255 = smul.addr %s254, 4
        %s256 = scalar_lea.vmem %s182, %s255
        %v257 = vld [vmem:[%s256] sm:$0xf]
        %v258 = vld [vmem:[%s256 + $0x4] sm:$0xf]
        %v259 = vld [vmem:[%s256 + $0xc] sm:$0xf]
        %v260 = vld [vmem:[%s256 + $0x10] sm:$0xf]
        %v261 = vld [vmem:[%s256 + $0x18] sm:$0xf]
        %v262 = vld [vmem:[%s256 + $0x1c] sm:$0xf]
        %v263 = vld [vmem:[%s256 + $0x24] sm:$0xf]
        %v264 = vld [vmem:[%s256 + $0x28] sm:$0xf]
        %v265 = vld [vmem:[%s256 + $0x30] sm:$0xf]
        %v266 = vld [vmem:[%s256 + $0x34] sm:$0xf]
        %v267 = vld [vmem:[%s256 + $0x3c] sm:$0xf]
        %v268 = vld [vmem:[%s256 + $0x40] sm:$0xf]
        %v269 = vld [vmem:[%s256 + $0x8] sm:$0x1]
        %v270 = vld [vmem:[%s256 + $0x14] sm:$0x1]
        %v271 = vld [vmem:[%s256 + $0x20] sm:$0x1]
        %v272 = vld [vmem:[%s256 + $0x2c] sm:$0x1]
        %v273 = vld [vmem:[%s256 + $0x38] sm:$0x1]
        %v274 = vld [vmem:[%s256 + $0x44] sm:$0x1]
        %v275 = vld [vmem:[%s256] sm:$0xe]
        %v276 = vld [vmem:[%s256 + $0xc] sm:$0xe]
        %v277 = vld [vmem:[%s256 + $0x18] sm:$0xe]
        %v278 = vld [vmem:[%s256 + $0x24] sm:$0xe]
        %v279 = vld [vmem:[%s256 + $0x30] sm:$0xe]
        %v280 = vld [vmem:[%s256 + $0x3c] sm:$0xe]
        %v281 = vld [vmem:[%s256 + $0x8] sm:$0x3]
        %v282 = vld [vmem:[%s256 + $0x14] sm:$0x3]
        %v283 = vld [vmem:[%s256 + $0x20] sm:$0x3]
        %v284 = vld [vmem:[%s256 + $0x2c] sm:$0x3]
        %v285 = vld [vmem:[%s256 + $0x38] sm:$0x3]
        %v286 = vld [vmem:[%s256 + $0x44] sm:$0x3]
        %s287 = sadd.s32 %s185, 3
        %s288 = smul.u32 %s287, 3
        %s289 = smul.addr %s288, 4
        %s290 = scalar_lea.vmem %s182, %s289
        %v291 = vld [vmem:[%s290] sm:$0xf]
        %v292 = vld [vmem:[%s290 + $0x4] sm:$0xf]
        %v293 = vld [vmem:[%s290 + $0xc] sm:$0xf]
        %v294 = vld [vmem:[%s290 + $0x10] sm:$0xf]
        %v295 = vld [vmem:[%s290 + $0x18] sm:$0xf]
        %v296 = vld [vmem:[%s290 + $0x1c] sm:$0xf]
        %v297 = vld [vmem:[%s290 + $0x24] sm:$0xf]
        %v298 = vld [vmem:[%s290 + $0x28] sm:$0xf]
        %v299 = vld [vmem:[%s290 + $0x30] sm:$0xf]
        %v300 = vld [vmem:[%s290 + $0x34] sm:$0xf]
        %v301 = vld [vmem:[%s290 + $0x3c] sm:$0xf]
        %v302 = vld [vmem:[%s290 + $0x40] sm:$0xf]
        %v303 = vld [vmem:[%s290 + $0x8] sm:$0x1]
        %v304 = vld [vmem:[%s290 + $0x14] sm:$0x1]
        %v305 = vld [vmem:[%s290 + $0x20] sm:$0x1]
        %v306 = vld [vmem:[%s290 + $0x2c] sm:$0x1]
        %v307 = vld [vmem:[%s290 + $0x38] sm:$0x1]
        %v308 = vld [vmem:[%s290 + $0x44] sm:$0x1]
        %v309 = vld [vmem:[%s290] sm:$0xe]
        %v310 = vld [vmem:[%s290 + $0xc] sm:$0xe]
        %v311 = vld [vmem:[%s290 + $0x18] sm:$0xe]
        %v312 = vld [vmem:[%s290 + $0x24] sm:$0xe]
        %v313 = vld [vmem:[%s290 + $0x30] sm:$0xe]
        %v314 = vld [vmem:[%s290 + $0x3c] sm:$0xe]
        %v315 = vld [vmem:[%s290 + $0x8] sm:$0x3]
        %v316 = vld [vmem:[%s290 + $0x14] sm:$0x3]
        %v317 = vld [vmem:[%s290 + $0x20] sm:$0x3]
        %v318 = vld [vmem:[%s290 + $0x2c] sm:$0x3]
        %v319 = vld [vmem:[%s290 + $0x38] sm:$0x3]
        %v320 = vld [vmem:[%s290 + $0x44] sm:$0x3]
        %v333 = vunpack.c.l.b16 %v189
        %v334 = vunpack.c.l.b16 %v190
        %v335 = vunpack.c.l.b16 %v191
        %v336 = vunpack.c.l.b16 %v192
        %v337 = vunpack.c.l.b16 %v193
        %v338 = vunpack.c.l.b16 %v194
        %v339 = vunpack.c.l.b16 %v195
        %v340 = vunpack.c.l.b16 %v196
        %v341 = vunpack.c.l.b16 %v197
        %v342 = vunpack.c.l.b16 %v198
        %v343 = vunpack.c.l.b16 %v199
        %v344 = vunpack.c.l.b16 %v200
        %v345 = vpack.c.b16 %v334, %v333
        %v346 = vpack.c.b16 %v336, %v335
        %v347 = vpack.c.b16 %v338, %v337
        %v348 = vpack.c.b16 %v340, %v339
        %v349 = vpack.c.b16 %v342, %v341
        %v350 = vpack.c.b16 %v344, %v343
        %v357 = vunpack.c.l.b16 %v201
        %v358 = vunpack.c.l.b16 %v202
        %v359 = vunpack.c.l.b16 %v203
        %v360 = vunpack.c.l.b16 %v204
        %v361 = vunpack.c.l.b16 %v205
        %v362 = vunpack.c.l.b16 %v206
        %v363 = vpack.c.b16 %v357, %v357
        %v364 = vpack.c.b16 %v358, %v358
        %v365 = vpack.c.b16 %v359, %v359
        %v366 = vpack.c.b16 %v360, %v360
        %v367 = vpack.c.b16 %v361, %v361
        %v368 = vpack.c.b16 %v362, %v362
        %vm369 = vsmask.f32 7424
        %v371 = vshrl.u32 %v345, 16
        %v373 = vshll.u32 %v345, 16
        %v375 = vrot.slane %v373, 1
        %v376 = vor.u32 %v371, %v375
        %v378 = vshll.u32 %v363, 16
        %v380 = vrot.slane %v378, 1
        %v381 = vsel %vm369, %v376, %v380
        %v383 = vshrl.u32 %v346, 16
        %v385 = vshll.u32 %v346, 16
        %v387 = vrot.slane %v385, 1
        %v388 = vor.u32 %v383, %v387
        %v390 = vshll.u32 %v364, 16
        %v392 = vrot.slane %v390, 1
        %v393 = vsel %vm369, %v388, %v392
        %v395 = vshrl.u32 %v347, 16
        %v397 = vshll.u32 %v347, 16
        %v399 = vrot.slane %v397, 1
        %v400 = vor.u32 %v395, %v399
        %v402 = vshll.u32 %v365, 16
        %v404 = vrot.slane %v402, 1
        %v405 = vsel %vm369, %v400, %v404
        %v407 = vshrl.u32 %v348, 16
        %v409 = vshll.u32 %v348, 16
        %v411 = vrot.slane %v409, 1
        %v412 = vor.u32 %v407, %v411
        %v414 = vshll.u32 %v366, 16
        %v416 = vrot.slane %v414, 1
        %v417 = vsel %vm369, %v412, %v416
        %v419 = vshrl.u32 %v349, 16
        %v421 = vshll.u32 %v349, 16
        %v423 = vrot.slane %v421, 1
        %v424 = vor.u32 %v419, %v423
        %v426 = vshll.u32 %v367, 16
        %v428 = vrot.slane %v426, 1
        %v429 = vsel %vm369, %v424, %v428
        %v431 = vshrl.u32 %v350, 16
        %v433 = vshll.u32 %v350, 16
        %v435 = vrot.slane %v433, 1
        %v436 = vor.u32 %v431, %v435
        %v438 = vshll.u32 %v368, 16
        %v440 = vrot.slane %v438, 1
        %v441 = vsel %vm369, %v436, %v440
        %442 = vrot.lane.b32.xlu0 %v381, 12
        %v443 = vpop.permute.xlu0 %442
        %444 = vrot.lane.b32.xlu0 %v393, 12
        %v445 = vpop.permute.xlu0 %444
        %446 = vrot.lane.b32.xlu0 %v405, 12
        %v447 = vpop.permute.xlu0 %446
        %448 = vrot.lane.b32.xlu0 %v417, 12
        %v449 = vpop.permute.xlu0 %448
        %450 = vrot.lane.b32.xlu0 %v429, 12
        %v451 = vpop.permute.xlu0 %450
        %452 = vrot.lane.b32.xlu0 %v441, 12
        %v453 = vpop.permute.xlu0 %452
        %v460 = vunpack.c.l.b16 %v207
        %v461 = vunpack.c.l.b16 %v208
        %v462 = vunpack.c.l.b16 %v209
        %v463 = vunpack.c.l.b16 %v210
        %v464 = vunpack.c.l.b16 %v211
        %v465 = vunpack.c.l.b16 %v212
        %v466 = vpack.c.b16 %v334, %v460
        %v467 = vpack.c.b16 %v336, %v461
        %v468 = vpack.c.b16 %v338, %v462
        %v469 = vpack.c.b16 %v340, %v463
        %v470 = vpack.c.b16 %v342, %v464
        %v471 = vpack.c.b16 %v344, %v465
        %vm472 = vcmask 1046528
        %v473 = vrot.slane %v466, 1
        %v474 = vrot.slane %v363, 1
        %v475 = vsel %vm472, %v473, %v474
        %v476 = vrot.slane %v467, 1
        %v477 = vrot.slane %v364, 1
        %v478 = vsel %vm472, %v476, %v477
        %v479 = vrot.slane %v468, 1
        %v480 = vrot.slane %v365, 1
        %v481 = vsel %vm472, %v479, %v480
        %v482 = vrot.slane %v469, 1
        %v483 = vrot.slane %v366, 1
        %v484 = vsel %vm472, %v482, %v483
        %v485 = vrot.slane %v470, 1
        %v486 = vrot.slane %v367, 1
        %v487 = vsel %vm472, %v485, %v486
        %v488 = vrot.slane %v471, 1
        %v489 = vrot.slane %v368, 1
        %v490 = vsel %vm472, %v488, %v489
        %491 = vrot.lane.b32.xlu0 %v475, 24
        %v492 = vpop.permute.xlu0 %491
        %493 = vrot.lane.b32.xlu0 %v478, 24
        %v494 = vpop.permute.xlu0 %493
        %495 = vrot.lane.b32.xlu0 %v481, 24
        %v496 = vpop.permute.xlu0 %495
        %497 = vrot.lane.b32.xlu0 %v484, 24
        %v498 = vpop.permute.xlu0 %497
        %499 = vrot.lane.b32.xlu0 %v487, 24
        %v500 = vpop.permute.xlu0 %499
        %501 = vrot.lane.b32.xlu0 %v490, 24
        %v502 = vpop.permute.xlu0 %501
        %v509 = vunpack.c.l.b16 %v213
        %v510 = vunpack.c.l.b16 %v214
        %v511 = vunpack.c.l.b16 %v215
        %v512 = vunpack.c.l.b16 %v216
        %v513 = vunpack.c.l.b16 %v217
        %v514 = vunpack.c.l.b16 %v218
        %v515 = vpack.c.b16 %v509, %v509
        %v516 = vpack.c.b16 %v510, %v510
        %v517 = vpack.c.b16 %v511, %v511
        %v518 = vpack.c.b16 %v512, %v512
        %v519 = vpack.c.b16 %v513, %v513
        %v520 = vpack.c.b16 %v514, %v514
        %vm521 = vsmask.f32 6400
        %v523 = vshrl.u32 %v466, 16
        %v525 = vrot.slane %v523, 1
        %v526 = vshll.u32 %v466, 16
        %v528 = vrot.slane %v526, 2
        %v529 = vor.u32 %v525, %v528
        %v531 = vshrl.u32 %v515, 16
        %v533 = vrot.slane %v531, 1
        %v534 = vshll.u32 %v515, 16
        %v536 = vrot.slane %v534, 2
        %v537 = vor.u32 %v533, %v536
        %v538 = vsel %vm521, %v529, %v537
        %v540 = vshrl.u32 %v467, 16
        %v542 = vrot.slane %v540, 1
        %v543 = vshll.u32 %v467, 16
        %v545 = vrot.slane %v543, 2
        %v546 = vor.u32 %v542, %v545
        %v548 = vshrl.u32 %v516, 16
        %v550 = vrot.slane %v548, 1
        %v551 = vshll.u32 %v516, 16
        %v553 = vrot.slane %v551, 2
        %v554 = vor.u32 %v550, %v553
        %v555 = vsel %vm521, %v546, %v554
        %v557 = vshrl.u32 %v468, 16
        %v559 = vrot.slane %v557, 1
        %v560 = vshll.u32 %v468, 16
        %v562 = vrot.slane %v560, 2
        %v563 = vor.u32 %v559, %v562
        %v565 = vshrl.u32 %v517, 16
        %v567 = vrot.slane %v565, 1
        %v568 = vshll.u32 %v517, 16
        %v570 = vrot.slane %v568, 2
        %v571 = vor.u32 %v567, %v570
        %v572 = vsel %vm521, %v563, %v571
        %v574 = vshrl.u32 %v469, 16
        %v576 = vrot.slane %v574, 1
        %v577 = vshll.u32 %v469, 16
        %v579 = vrot.slane %v577, 2
        %v580 = vor.u32 %v576, %v579
        %v582 = vshrl.u32 %v518, 16
        %v584 = vrot.slane %v582, 1
        %v585 = vshll.u32 %v518, 16
        %v587 = vrot.slane %v585, 2
        %v588 = vor.u32 %v584, %v587
        %v589 = vsel %vm521, %v580, %v588
        %v591 = vshrl.u32 %v470, 16
        %v593 = vrot.slane %v591, 1
        %v594 = vshll.u32 %v470, 16
        %v596 = vrot.slane %v594, 2
        %v597 = vor.u32 %v593, %v596
        %v599 = vshrl.u32 %v519, 16
        %v601 = vrot.slane %v599, 1
        %v602 = vshll.u32 %v519, 16
        %v604 = vrot.slane %v602, 2
        %v605 = vor.u32 %v601, %v604
        %v606 = vsel %vm521, %v597, %v605
        %v608 = vshrl.u32 %v471, 16
        %v610 = vrot.slane %v608, 1
        %v611 = vshll.u32 %v471, 16
        %v613 = vrot.slane %v611, 2
        %v614 = vor.u32 %v610, %v613
        %v616 = vshrl.u32 %v520, 16
        %v618 = vrot.slane %v616, 1
        %v619 = vshll.u32 %v520, 16
        %v621 = vrot.slane %v619, 2
        %v622 = vor.u32 %v618, %v621
        %v623 = vsel %vm521, %v614, %v622
        %624 = vrot.lane.b32.xlu0 %v538, 36
        %v625 = vpop.permute.xlu0 %624
        %626 = vrot.lane.b32.xlu0 %v555, 36
        %v627 = vpop.permute.xlu0 %626
        %628 = vrot.lane.b32.xlu0 %v572, 36
        %v629 = vpop.permute.xlu0 %628
        %630 = vrot.lane.b32.xlu0 %v589, 36
        %v631 = vpop.permute.xlu0 %630
        %632 = vrot.lane.b32.xlu0 %v606, 36
        %v633 = vpop.permute.xlu0 %632
        %634 = vrot.lane.b32.xlu0 %v623, 36
        %v635 = vpop.permute.xlu0 %634
        %v648 = vunpack.c.l.b16 %v223
        %v649 = vunpack.c.l.b16 %v224
        %v650 = vunpack.c.l.b16 %v225
        %v651 = vunpack.c.l.b16 %v226
        %v652 = vunpack.c.l.b16 %v227
        %v653 = vunpack.c.l.b16 %v228
        %v654 = vunpack.c.l.b16 %v229
        %v655 = vunpack.c.l.b16 %v230
        %v656 = vunpack.c.l.b16 %v231
        %v657 = vunpack.c.l.b16 %v232
        %v658 = vunpack.c.l.b16 %v233
        %v659 = vunpack.c.l.b16 %v234
        %v660 = vpack.c.b16 %v649, %v648
        %v661 = vpack.c.b16 %v651, %v650
        %v662 = vpack.c.b16 %v653, %v652
        %v663 = vpack.c.b16 %v655, %v654
        %v664 = vpack.c.b16 %v657, %v656
        %v665 = vpack.c.b16 %v659, %v658
        %666 = vrot.lane.b32.xlu0 %v660, 48
        %v667 = vpop.permute.xlu0 %666
        %668 = vrot.lane.b32.xlu0 %v661, 48
        %v669 = vpop.permute.xlu0 %668
        %670 = vrot.lane.b32.xlu0 %v662, 48
        %v671 = vpop.permute.xlu0 %670
        %672 = vrot.lane.b32.xlu0 %v663, 48
        %v673 = vpop.permute.xlu0 %672
        %674 = vrot.lane.b32.xlu0 %v664, 48
        %v675 = vpop.permute.xlu0 %674
        %676 = vrot.lane.b32.xlu0 %v665, 48
        %v677 = vpop.permute.xlu0 %676
        %v684 = vunpack.c.l.b16 %v235
        %v685 = vunpack.c.l.b16 %v236
        %v686 = vunpack.c.l.b16 %v237
        %v687 = vunpack.c.l.b16 %v238
        %v688 = vunpack.c.l.b16 %v239
        %v689 = vunpack.c.l.b16 %v240
        %v690 = vpack.c.b16 %v684, %v684
        %v691 = vpack.c.b16 %v685, %v685
        %v692 = vpack.c.b16 %v686, %v686
        %v693 = vpack.c.b16 %v687, %v687
        %v694 = vpack.c.b16 %v688, %v688
        %v695 = vpack.c.b16 %v689, %v689
        %v697 = vshrl.u32 %v660, 16
        %v699 = vshll.u32 %v660, 16
        %v701 = vrot.slane %v699, 1
        %v702 = vor.u32 %v697, %v701
        %v704 = vshll.u32 %v690, 16
        %v706 = vrot.slane %v704, 1
        %v707 = vsel %vm369, %v702, %v706
        %v709 = vshrl.u32 %v661, 16
        %v711 = vshll.u32 %v661, 16
        %v713 = vrot.slane %v711, 1
        %v714 = vor.u32 %v709, %v713
        %v716 = vshll.u32 %v691, 16
        %v718 = vrot.slane %v716, 1
        %v719 = vsel %vm369, %v714, %v718
        %v721 = vshrl.u32 %v662, 16
        %v723 = vshll.u32 %v662, 16
        %v725 = vrot.slane %v723, 1
        %v726 = vor.u32 %v721, %v725
        %v728 = vshll.u32 %v692, 16
        %v730 = vrot.slane %v728, 1
        %v731 = vsel %vm369, %v726, %v730
        %v733 = vshrl.u32 %v663, 16
        %v735 = vshll.u32 %v663, 16
        %v737 = vrot.slane %v735, 1
        %v738 = vor.u32 %v733, %v737
        %v740 = vshll.u32 %v693, 16
        %v742 = vrot.slane %v740, 1
        %v743 = vsel %vm369, %v738, %v742
        %v745 = vshrl.u32 %v664, 16
        %v747 = vshll.u32 %v664, 16
        %v749 = vrot.slane %v747, 1
        %v750 = vor.u32 %v745, %v749
        %v752 = vshll.u32 %v694, 16
        %v754 = vrot.slane %v752, 1
        %v755 = vsel %vm369, %v750, %v754
        %v757 = vshrl.u32 %v665, 16
        %v759 = vshll.u32 %v665, 16
        %v761 = vrot.slane %v759, 1
        %v762 = vor.u32 %v757, %v761
        %v764 = vshll.u32 %v695, 16
        %v766 = vrot.slane %v764, 1
        %v767 = vsel %vm369, %v762, %v766
        %768 = vrot.lane.b32.xlu0 %v707, 60
        %v769 = vpop.permute.xlu0 %768
        %770 = vrot.lane.b32.xlu0 %v719, 60
        %v771 = vpop.permute.xlu0 %770
        %772 = vrot.lane.b32.xlu0 %v731, 60
        %v773 = vpop.permute.xlu0 %772
        %774 = vrot.lane.b32.xlu0 %v743, 60
        %v775 = vpop.permute.xlu0 %774
        %776 = vrot.lane.b32.xlu0 %v755, 60
        %v777 = vpop.permute.xlu0 %776
        %778 = vrot.lane.b32.xlu0 %v767, 60
        %v779 = vpop.permute.xlu0 %778
        %v786 = vunpack.c.l.b16 %v241
        %v787 = vunpack.c.l.b16 %v242
        %v788 = vunpack.c.l.b16 %v243
        %v789 = vunpack.c.l.b16 %v244
        %v790 = vunpack.c.l.b16 %v245
        %v791 = vunpack.c.l.b16 %v246
        %v792 = vpack.c.b16 %v649, %v786
        %v793 = vpack.c.b16 %v651, %v787
        %v794 = vpack.c.b16 %v653, %v788
        %v795 = vpack.c.b16 %v655, %v789
        %v796 = vpack.c.b16 %v657, %v790
        %v797 = vpack.c.b16 %v659, %v791
        %v798 = vrot.slane %v792, 1
        %v799 = vrot.slane %v690, 1
        %v800 = vsel %vm472, %v798, %v799
        %v801 = vrot.slane %v793, 1
        %v802 = vrot.slane %v691, 1
        %v803 = vsel %vm472, %v801, %v802
        %v804 = vrot.slane %v794, 1
        %v805 = vrot.slane %v692, 1
        %v806 = vsel %vm472, %v804, %v805
        %v807 = vrot.slane %v795, 1
        %v808 = vrot.slane %v693, 1
        %v809 = vsel %vm472, %v807, %v808
        %v810 = vrot.slane %v796, 1
        %v811 = vrot.slane %v694, 1
        %v812 = vsel %vm472, %v810, %v811
        %v813 = vrot.slane %v797, 1
        %v814 = vrot.slane %v695, 1
        %v815 = vsel %vm472, %v813, %v814
        %816 = vrot.lane.b32.xlu0 %v800, 72
        %v817 = vpop.permute.xlu0 %816
        %818 = vrot.lane.b32.xlu0 %v803, 72
        %v819 = vpop.permute.xlu0 %818
        %820 = vrot.lane.b32.xlu0 %v806, 72
        %v821 = vpop.permute.xlu0 %820
        %822 = vrot.lane.b32.xlu0 %v809, 72
        %v823 = vpop.permute.xlu0 %822
        %824 = vrot.lane.b32.xlu0 %v812, 72
        %v825 = vpop.permute.xlu0 %824
        %826 = vrot.lane.b32.xlu0 %v815, 72
        %v827 = vpop.permute.xlu0 %826
        %v834 = vunpack.c.l.b16 %v247
        %v835 = vunpack.c.l.b16 %v248
        %v836 = vunpack.c.l.b16 %v249
        %v837 = vunpack.c.l.b16 %v250
        %v838 = vunpack.c.l.b16 %v251
        %v839 = vunpack.c.l.b16 %v252
        %v840 = vpack.c.b16 %v834, %v834
        %v841 = vpack.c.b16 %v835, %v835
        %v842 = vpack.c.b16 %v836, %v836
        %v843 = vpack.c.b16 %v837, %v837
        %v844 = vpack.c.b16 %v838, %v838
        %v845 = vpack.c.b16 %v839, %v839
        %v847 = vshrl.u32 %v792, 16
        %v849 = vrot.slane %v847, 1
        %v850 = vshll.u32 %v792, 16
        %v852 = vrot.slane %v850, 2
        %v853 = vor.u32 %v849, %v852
        %v855 = vshrl.u32 %v840, 16
        %v857 = vrot.slane %v855, 1
        %v858 = vshll.u32 %v840, 16
        %v860 = vrot.slane %v858, 2
        %v861 = vor.u32 %v857, %v860
        %v862 = vsel %vm521, %v853, %v861
        %v864 = vshrl.u32 %v793, 16
        %v866 = vrot.slane %v864, 1
        %v867 = vshll.u32 %v793, 16
        %v869 = vrot.slane %v867, 2
        %v870 = vor.u32 %v866, %v869
        %v872 = vshrl.u32 %v841, 16
        %v874 = vrot.slane %v872, 1
        %v875 = vshll.u32 %v841, 16
        %v877 = vrot.slane %v875, 2
        %v878 = vor.u32 %v874, %v877
        %v879 = vsel %vm521, %v870, %v878
        %v881 = vshrl.u32 %v794, 16
        %v883 = vrot.slane %v881, 1
        %v884 = vshll.u32 %v794, 16
        %v886 = vrot.slane %v884, 2
        %v887 = vor.u32 %v883, %v886
        %v889 = vshrl.u32 %v842, 16
        %v891 = vrot.slane %v889, 1
        %v892 = vshll.u32 %v842, 16
        %v894 = vrot.slane %v892, 2
        %v895 = vor.u32 %v891, %v894
        %v896 = vsel %vm521, %v887, %v895
        %v898 = vshrl.u32 %v795, 16
        %v900 = vrot.slane %v898, 1
        %v901 = vshll.u32 %v795, 16
        %v903 = vrot.slane %v901, 2
        %v904 = vor.u32 %v900, %v903
        %v906 = vshrl.u32 %v843, 16
        %v908 = vrot.slane %v906, 1
        %v909 = vshll.u32 %v843, 16
        %v911 = vrot.slane %v909, 2
        %v912 = vor.u32 %v908, %v911
        %v913 = vsel %vm521, %v904, %v912
        %v915 = vshrl.u32 %v796, 16
        %v917 = vrot.slane %v915, 1
        %v918 = vshll.u32 %v796, 16
        %v920 = vrot.slane %v918, 2
        %v921 = vor.u32 %v917, %v920
        %v923 = vshrl.u32 %v844, 16
        %v925 = vrot.slane %v923, 1
        %v926 = vshll.u32 %v844, 16
        %v928 = vrot.slane %v926, 2
        %v929 = vor.u32 %v925, %v928
        %v930 = vsel %vm521, %v921, %v929
        %v932 = vshrl.u32 %v797, 16
        %v934 = vrot.slane %v932, 1
        %v935 = vshll.u32 %v797, 16
        %v937 = vrot.slane %v935, 2
        %v938 = vor.u32 %v934, %v937
        %v940 = vshrl.u32 %v845, 16
        %v942 = vrot.slane %v940, 1
        %v943 = vshll.u32 %v845, 16
        %v945 = vrot.slane %v943, 2
        %v946 = vor.u32 %v942, %v945
        %v947 = vsel %vm521, %v938, %v946
        %948 = vrot.lane.b32.xlu0 %v862, 84
        %v949 = vpop.permute.xlu0 %948
        %950 = vrot.lane.b32.xlu0 %v879, 84
        %v951 = vpop.permute.xlu0 %950
        %952 = vrot.lane.b32.xlu0 %v896, 84
        %v953 = vpop.permute.xlu0 %952
        %954 = vrot.lane.b32.xlu0 %v913, 84
        %v955 = vpop.permute.xlu0 %954
        %956 = vrot.lane.b32.xlu0 %v930, 84
        %v957 = vpop.permute.xlu0 %956
        %958 = vrot.lane.b32.xlu0 %v947, 84
        %v959 = vpop.permute.xlu0 %958
        %v972 = vunpack.c.l.b16 %v257
        %v973 = vunpack.c.l.b16 %v258
        %v974 = vunpack.c.l.b16 %v259
        %v975 = vunpack.c.l.b16 %v260
        %v976 = vunpack.c.l.b16 %v261
        %v977 = vunpack.c.l.b16 %v262
        %v978 = vunpack.c.l.b16 %v263
        %v979 = vunpack.c.l.b16 %v264
        %v980 = vunpack.c.l.b16 %v265
        %v981 = vunpack.c.l.b16 %v266
        %v982 = vunpack.c.l.b16 %v267
        %v983 = vunpack.c.l.b16 %v268
        %v984 = vpack.c.b16 %v973, %v972
        %v985 = vpack.c.b16 %v975, %v974
        %v986 = vpack.c.b16 %v977, %v976
        %v987 = vpack.c.b16 %v979, %v978
        %v988 = vpack.c.b16 %v981, %v980
        %v989 = vpack.c.b16 %v983, %v982
        %990 = vrot.lane.b32.xlu0 %v984, 96
        %v991 = vpop.permute.xlu0 %990
        %992 = vrot.lane.b32.xlu0 %v985, 96
        %v993 = vpop.permute.xlu0 %992
        %994 = vrot.lane.b32.xlu0 %v986, 96
        %v995 = vpop.permute.xlu0 %994
        %996 = vrot.lane.b32.xlu0 %v987, 96
        %v997 = vpop.permute.xlu0 %996
        %998 = vrot.lane.b32.xlu0 %v988, 96
        %v999 = vpop.permute.xlu0 %998
        %1000 = vrot.lane.b32.xlu0 %v989, 96
        %v1001 = vpop.permute.xlu0 %1000
        %v1008 = vunpack.c.l.b16 %v269
        %v1009 = vunpack.c.l.b16 %v270
        %v1010 = vunpack.c.l.b16 %v271
        %v1011 = vunpack.c.l.b16 %v272
        %v1012 = vunpack.c.l.b16 %v273
        %v1013 = vunpack.c.l.b16 %v274
        %v1014 = vpack.c.b16 %v1008, %v1008
        %v1015 = vpack.c.b16 %v1009, %v1009
        %v1016 = vpack.c.b16 %v1010, %v1010
        %v1017 = vpack.c.b16 %v1011, %v1011
        %v1018 = vpack.c.b16 %v1012, %v1012
        %v1019 = vpack.c.b16 %v1013, %v1013
        %v1021 = vshrl.u32 %v984, 16
        %v1023 = vshll.u32 %v984, 16
        %v1025 = vrot.slane %v1023, 1
        %v1026 = vor.u32 %v1021, %v1025
        %v1028 = vshll.u32 %v1014, 16
        %v1030 = vrot.slane %v1028, 1
        %v1031 = vsel %vm369, %v1026, %v1030
        %v1033 = vshrl.u32 %v985, 16
        %v1035 = vshll.u32 %v985, 16
        %v1037 = vrot.slane %v1035, 1
        %v1038 = vor.u32 %v1033, %v1037
        %v1040 = vshll.u32 %v1015, 16
        %v1042 = vrot.slane %v1040, 1
        %v1043 = vsel %vm369, %v1038, %v1042
        %v1045 = vshrl.u32 %v986, 16
        %v1047 = vshll.u32 %v986, 16
        %v1049 = vrot.slane %v1047, 1
        %v1050 = vor.u32 %v1045, %v1049
        %v1052 = vshll.u32 %v1016, 16
        %v1054 = vrot.slane %v1052, 1
        %v1055 = vsel %vm369, %v1050, %v1054
        %v1057 = vshrl.u32 %v987, 16
        %v1059 = vshll.u32 %v987, 16
        %v1061 = vrot.slane %v1059, 1
        %v1062 = vor.u32 %v1057, %v1061
        %v1064 = vshll.u32 %v1017, 16
        %v1066 = vrot.slane %v1064, 1
        %v1067 = vsel %vm369, %v1062, %v1066
        %v1069 = vshrl.u32 %v988, 16
        %v1071 = vshll.u32 %v988, 16
        %v1073 = vrot.slane %v1071, 1
        %v1074 = vor.u32 %v1069, %v1073
        %v1076 = vshll.u32 %v1018, 16
        %v1078 = vrot.slane %v1076, 1
        %v1079 = vsel %vm369, %v1074, %v1078
        %v1081 = vshrl.u32 %v989, 16
        %v1083 = vshll.u32 %v989, 16
        %v1085 = vrot.slane %v1083, 1
        %v1086 = vor.u32 %v1081, %v1085
        %v1088 = vshll.u32 %v1019, 16
        %v1090 = vrot.slane %v1088, 1
        %v1091 = vsel %vm369, %v1086, %v1090
        %1092 = vrot.lane.b32.xlu0 %v1031, 108
        %v1093 = vpop.permute.xlu0 %1092
        %1094 = vrot.lane.b32.xlu0 %v1043, 108
        %v1095 = vpop.permute.xlu0 %1094
        %1096 = vrot.lane.b32.xlu0 %v1055, 108
        %v1097 = vpop.permute.xlu0 %1096
        %1098 = vrot.lane.b32.xlu0 %v1067, 108
        %v1099 = vpop.permute.xlu0 %1098
        %1100 = vrot.lane.b32.xlu0 %v1079, 108
        %v1101 = vpop.permute.xlu0 %1100
        %1102 = vrot.lane.b32.xlu0 %v1091, 108
        %v1103 = vpop.permute.xlu0 %1102
        %v1110 = vunpack.c.l.b16 %v275
        %v1111 = vunpack.c.l.b16 %v276
        %v1112 = vunpack.c.l.b16 %v277
        %v1113 = vunpack.c.l.b16 %v278
        %v1114 = vunpack.c.l.b16 %v279
        %v1115 = vunpack.c.l.b16 %v280
        %v1116 = vpack.c.b16 %v973, %v1110
        %v1117 = vpack.c.b16 %v975, %v1111
        %v1118 = vpack.c.b16 %v977, %v1112
        %v1119 = vpack.c.b16 %v979, %v1113
        %v1120 = vpack.c.b16 %v981, %v1114
        %v1121 = vpack.c.b16 %v983, %v1115
        %v1122 = vrot.slane %v1116, 1
        %v1123 = vrot.slane %v1014, 1
        %v1124 = vsel %vm472, %v1122, %v1123
        %v1125 = vrot.slane %v1117, 1
        %v1126 = vrot.slane %v1015, 1
        %v1127 = vsel %vm472, %v1125, %v1126
        %v1128 = vrot.slane %v1118, 1
        %v1129 = vrot.slane %v1016, 1
        %v1130 = vsel %vm472, %v1128, %v1129
        %v1131 = vrot.slane %v1119, 1
        %v1132 = vrot.slane %v1017, 1
        %v1133 = vsel %vm472, %v1131, %v1132
        %v1134 = vrot.slane %v1120, 1
        %v1135 = vrot.slane %v1018, 1
        %v1136 = vsel %vm472, %v1134, %v1135
        %v1137 = vrot.slane %v1121, 1
        %v1138 = vrot.slane %v1019, 1
        %v1139 = vsel %vm472, %v1137, %v1138
        %1140 = vrot.lane.b32.xlu0 %v1124, 120
        %v1141 = vpop.permute.xlu0 %1140
        %1142 = vrot.lane.b32.xlu0 %v1127, 120
        %v1143 = vpop.permute.xlu0 %1142
        %1144 = vrot.lane.b32.xlu0 %v1130, 120
        %v1145 = vpop.permute.xlu0 %1144
        %1146 = vrot.lane.b32.xlu0 %v1133, 120
        %v1147 = vpop.permute.xlu0 %1146
        %1148 = vrot.lane.b32.xlu0 %v1136, 120
        %v1149 = vpop.permute.xlu0 %1148
        %1150 = vrot.lane.b32.xlu0 %v1139, 120
        %v1151 = vpop.permute.xlu0 %1150
        %v1158 = vunpack.c.l.b16 %v281
        %v1159 = vunpack.c.l.b16 %v282
        %v1160 = vunpack.c.l.b16 %v283
        %v1161 = vunpack.c.l.b16 %v284
        %v1162 = vunpack.c.l.b16 %v285
        %v1163 = vunpack.c.l.b16 %v286
        %v1164 = vpack.c.b16 %v1158, %v1158
        %v1165 = vpack.c.b16 %v1159, %v1159
        %v1166 = vpack.c.b16 %v1160, %v1160
        %v1167 = vpack.c.b16 %v1161, %v1161
        %v1168 = vpack.c.b16 %v1162, %v1162
        %v1169 = vpack.c.b16 %v1163, %v1163
        %v1171 = vshrl.u32 %v1116, 16
        %v1173 = vrot.slane %v1171, 1
        %v1174 = vshll.u32 %v1116, 16
        %v1176 = vrot.slane %v1174, 2
        %v1177 = vor.u32 %v1173, %v1176
        %v1179 = vshrl.u32 %v1164, 16
        %v1181 = vrot.slane %v1179, 1
        %v1182 = vshll.u32 %v1164, 16
        %v1184 = vrot.slane %v1182, 2
        %v1185 = vor.u32 %v1181, %v1184
        %v1186 = vsel %vm521, %v1177, %v1185
        %v1188 = vshrl.u32 %v1117, 16
        %v1190 = vrot.slane %v1188, 1
        %v1191 = vshll.u32 %v1117, 16
        %v1193 = vrot.slane %v1191, 2
        %v1194 = vor.u32 %v1190, %v1193
        %v1196 = vshrl.u32 %v1165, 16
        %v1198 = vrot.slane %v1196, 1
        %v1199 = vshll.u32 %v1165, 16
        %v1201 = vrot.slane %v1199, 2
        %v1202 = vor.u32 %v1198, %v1201
        %v1203 = vsel %vm521, %v1194, %v1202
        %v1205 = vshrl.u32 %v1118, 16
        %v1207 = vrot.slane %v1205, 1
        %v1208 = vshll.u32 %v1118, 16
        %v1210 = vrot.slane %v1208, 2
        %v1211 = vor.u32 %v1207, %v1210
        %v1213 = vshrl.u32 %v1166, 16
        %v1215 = vrot.slane %v1213, 1
        %v1216 = vshll.u32 %v1166, 16
        %v1218 = vrot.slane %v1216, 2
        %v1219 = vor.u32 %v1215, %v1218
        %v1220 = vsel %vm521, %v1211, %v1219
        %v1222 = vshrl.u32 %v1119, 16
        %v1224 = vrot.slane %v1222, 1
        %v1225 = vshll.u32 %v1119, 16
        %v1227 = vrot.slane %v1225, 2
        %v1228 = vor.u32 %v1224, %v1227
        %v1230 = vshrl.u32 %v1167, 16
        %v1232 = vrot.slane %v1230, 1
        %v1233 = vshll.u32 %v1167, 16
        %v1235 = vrot.slane %v1233, 2
        %v1236 = vor.u32 %v1232, %v1235
        %v1237 = vsel %vm521, %v1228, %v1236
        %v1239 = vshrl.u32 %v1120, 16
        %v1241 = vrot.slane %v1239, 1
        %v1242 = vshll.u32 %v1120, 16
        %v1244 = vrot.slane %v1242, 2
        %v1245 = vor.u32 %v1241, %v1244
        %v1247 = vshrl.u32 %v1168, 16
        %v1249 = vrot.slane %v1247, 1
        %v1250 = vshll.u32 %v1168, 16
        %v1252 = vrot.slane %v1250, 2
        %v1253 = vor.u32 %v1249, %v1252
        %v1254 = vsel %vm521, %v1245, %v1253
        %v1256 = vshrl.u32 %v1121, 16
        %v1258 = vrot.slane %v1256, 1
        %v1259 = vshll.u32 %v1121, 16
        %v1261 = vrot.slane %v1259, 2
        %v1262 = vor.u32 %v1258, %v1261
        %v1264 = vshrl.u32 %v1169, 16
        %v1266 = vrot.slane %v1264, 1
        %v1267 = vshll.u32 %v1169, 16
        %v1269 = vrot.slane %v1267, 2
        %v1270 = vor.u32 %v1266, %v1269
        %v1271 = vsel %vm521, %v1262, %v1270
        %1272 = vrot.lane.b32.xlu0 %v1186, 4
        %v1273 = vpop.permute.xlu0 %1272
        %1274 = vrot.lane.b32.xlu0 %v1203, 4
        %v1275 = vpop.permute.xlu0 %1274
        %1276 = vrot.lane.b32.xlu0 %v1220, 4
        %v1277 = vpop.permute.xlu0 %1276
        %1278 = vrot.lane.b32.xlu0 %v1237, 4
        %v1279 = vpop.permute.xlu0 %1278
        %1280 = vrot.lane.b32.xlu0 %v1254, 4
        %v1281 = vpop.permute.xlu0 %1280
        %1282 = vrot.lane.b32.xlu0 %v1271, 4
        %v1283 = vpop.permute.xlu0 %1282
        %v1296 = vunpack.c.l.b16 %v291
        %v1297 = vunpack.c.l.b16 %v292
        %v1298 = vunpack.c.l.b16 %v293
        %v1299 = vunpack.c.l.b16 %v294
        %v1300 = vunpack.c.l.b16 %v295
        %v1301 = vunpack.c.l.b16 %v296
        %v1302 = vunpack.c.l.b16 %v297
        %v1303 = vunpack.c.l.b16 %v298
        %v1304 = vunpack.c.l.b16 %v299
        %v1305 = vunpack.c.l.b16 %v300
        %v1306 = vunpack.c.l.b16 %v301
        %v1307 = vunpack.c.l.b16 %v302
        %v1308 = vpack.c.b16 %v1297, %v1296
        %v1309 = vpack.c.b16 %v1299, %v1298
        %v1310 = vpack.c.b16 %v1301, %v1300
        %v1311 = vpack.c.b16 %v1303, %v1302
        %v1312 = vpack.c.b16 %v1305, %v1304
        %v1313 = vpack.c.b16 %v1307, %v1306
        %1314 = vrot.lane.b32.xlu0 %v1308, 16
        %v1315 = vpop.permute.xlu0 %1314
        %1316 = vrot.lane.b32.xlu0 %v1309, 16
        %v1317 = vpop.permute.xlu0 %1316
        %1318 = vrot.lane.b32.xlu0 %v1310, 16
        %v1319 = vpop.permute.xlu0 %1318
        %1320 = vrot.lane.b32.xlu0 %v1311, 16
        %v1321 = vpop.permute.xlu0 %1320
        %1322 = vrot.lane.b32.xlu0 %v1312, 16
        %v1323 = vpop.permute.xlu0 %1322
        %1324 = vrot.lane.b32.xlu0 %v1313, 16
        %v1325 = vpop.permute.xlu0 %1324
        %v1332 = vunpack.c.l.b16 %v303
        %v1333 = vunpack.c.l.b16 %v304
        %v1334 = vunpack.c.l.b16 %v305
        %v1335 = vunpack.c.l.b16 %v306
        %v1336 = vunpack.c.l.b16 %v307
        %v1337 = vunpack.c.l.b16 %v308
        %v1338 = vpack.c.b16 %v1332, %v1332
        %v1339 = vpack.c.b16 %v1333, %v1333
        %v1340 = vpack.c.b16 %v1334, %v1334
        %v1341 = vpack.c.b16 %v1335, %v1335
        %v1342 = vpack.c.b16 %v1336, %v1336
        %v1343 = vpack.c.b16 %v1337, %v1337
        %v1345 = vshrl.u32 %v1308, 16
        %v1347 = vshll.u32 %v1308, 16
        %v1349 = vrot.slane %v1347, 1
        %v1350 = vor.u32 %v1345, %v1349
        %v1352 = vshll.u32 %v1338, 16
        %v1354 = vrot.slane %v1352, 1
        %v1355 = vsel %vm369, %v1350, %v1354
        %v1357 = vshrl.u32 %v1309, 16
        %v1359 = vshll.u32 %v1309, 16
        %v1361 = vrot.slane %v1359, 1
        %v1362 = vor.u32 %v1357, %v1361
        %v1364 = vshll.u32 %v1339, 16
        %v1366 = vrot.slane %v1364, 1
        %v1367 = vsel %vm369, %v1362, %v1366
        %v1369 = vshrl.u32 %v1310, 16
        %v1371 = vshll.u32 %v1310, 16
        %v1373 = vrot.slane %v1371, 1
        %v1374 = vor.u32 %v1369, %v1373
        %v1376 = vshll.u32 %v1340, 16
        %v1378 = vrot.slane %v1376, 1
        %v1379 = vsel %vm369, %v1374, %v1378
        %v1381 = vshrl.u32 %v1311, 16
        %v1383 = vshll.u32 %v1311, 16
        %v1385 = vrot.slane %v1383, 1
        %v1386 = vor.u32 %v1381, %v1385
        %v1388 = vshll.u32 %v1341, 16
        %v1390 = vrot.slane %v1388, 1
        %v1391 = vsel %vm369, %v1386, %v1390
        %v1393 = vshrl.u32 %v1312, 16
        %v1395 = vshll.u32 %v1312, 16
        %v1397 = vrot.slane %v1395, 1
        %v1398 = vor.u32 %v1393, %v1397
        %v1400 = vshll.u32 %v1342, 16
        %v1402 = vrot.slane %v1400, 1
        %v1403 = vsel %vm369, %v1398, %v1402
        %v1405 = vshrl.u32 %v1313, 16
        %v1407 = vshll.u32 %v1313, 16
        %v1409 = vrot.slane %v1407, 1
        %v1410 = vor.u32 %v1405, %v1409
        %v1412 = vshll.u32 %v1343, 16
        %v1414 = vrot.slane %v1412, 1
        %v1415 = vsel %vm369, %v1410, %v1414
        %1416 = vrot.lane.b32.xlu0 %v1355, 28
        %v1417 = vpop.permute.xlu0 %1416
        %1418 = vrot.lane.b32.xlu0 %v1367, 28
        %v1419 = vpop.permute.xlu0 %1418
        %1420 = vrot.lane.b32.xlu0 %v1379, 28
        %v1421 = vpop.permute.xlu0 %1420
        %1422 = vrot.lane.b32.xlu0 %v1391, 28
        %v1423 = vpop.permute.xlu0 %1422
        %1424 = vrot.lane.b32.xlu0 %v1403, 28
        %v1425 = vpop.permute.xlu0 %1424
        %1426 = vrot.lane.b32.xlu0 %v1415, 28
        %v1427 = vpop.permute.xlu0 %1426
        %v1434 = vunpack.c.l.b16 %v309
        %v1435 = vunpack.c.l.b16 %v310
        %v1436 = vunpack.c.l.b16 %v311
        %v1437 = vunpack.c.l.b16 %v312
        %v1438 = vunpack.c.l.b16 %v313
        %v1439 = vunpack.c.l.b16 %v314
        %v1440 = vpack.c.b16 %v1297, %v1434
        %v1441 = vpack.c.b16 %v1299, %v1435
        %v1442 = vpack.c.b16 %v1301, %v1436
        %v1443 = vpack.c.b16 %v1303, %v1437
        %v1444 = vpack.c.b16 %v1305, %v1438
        %v1445 = vpack.c.b16 %v1307, %v1439
        %v1446 = vrot.slane %v1440, 1
        %v1447 = vrot.slane %v1338, 1
        %v1448 = vsel %vm472, %v1446, %v1447
        %v1449 = vrot.slane %v1441, 1
        %v1450 = vrot.slane %v1339, 1
        %v1451 = vsel %vm472, %v1449, %v1450
        %v1452 = vrot.slane %v1442, 1
        %v1453 = vrot.slane %v1340, 1
        %v1454 = vsel %vm472, %v1452, %v1453
        %v1455 = vrot.slane %v1443, 1
        %v1456 = vrot.slane %v1341, 1
        %v1457 = vsel %vm472, %v1455, %v1456
        %v1458 = vrot.slane %v1444, 1
        %v1459 = vrot.slane %v1342, 1
        %v1460 = vsel %vm472, %v1458, %v1459
        %v1461 = vrot.slane %v1445, 1
        %v1462 = vrot.slane %v1343, 1
        %v1463 = vsel %vm472, %v1461, %v1462
        %1464 = vrot.lane.b32.xlu0 %v1448, 40
        %v1465 = vpop.permute.xlu0 %1464
        %1466 = vrot.lane.b32.xlu0 %v1451, 40
        %v1467 = vpop.permute.xlu0 %1466
        %1468 = vrot.lane.b32.xlu0 %v1454, 40
        %v1469 = vpop.permute.xlu0 %1468
        %1470 = vrot.lane.b32.xlu0 %v1457, 40
        %v1471 = vpop.permute.xlu0 %1470
        %1472 = vrot.lane.b32.xlu0 %v1460, 40
        %v1473 = vpop.permute.xlu0 %1472
        %1474 = vrot.lane.b32.xlu0 %v1463, 40
        %v1475 = vpop.permute.xlu0 %1474
        %v1482 = vunpack.c.l.b16 %v315
        %v1483 = vunpack.c.l.b16 %v316
        %v1484 = vunpack.c.l.b16 %v317
        %v1485 = vunpack.c.l.b16 %v318
        %v1486 = vunpack.c.l.b16 %v319
        %v1487 = vunpack.c.l.b16 %v320
        %v1488 = vpack.c.b16 %v1482, %v1482
        %v1489 = vpack.c.b16 %v1483, %v1483
        %v1490 = vpack.c.b16 %v1484, %v1484
        %v1491 = vpack.c.b16 %v1485, %v1485
        %v1492 = vpack.c.b16 %v1486, %v1486
        %v1493 = vpack.c.b16 %v1487, %v1487
        %v1495 = vshrl.u32 %v1440, 16
        %v1497 = vrot.slane %v1495, 1
        %v1498 = vshll.u32 %v1440, 16
        %v1500 = vrot.slane %v1498, 2
        %v1501 = vor.u32 %v1497, %v1500
        %v1503 = vshrl.u32 %v1488, 16
        %v1505 = vrot.slane %v1503, 1
        %v1506 = vshll.u32 %v1488, 16
        %v1508 = vrot.slane %v1506, 2
        %v1509 = vor.u32 %v1505, %v1508
        %v1510 = vsel %vm521, %v1501, %v1509
        %v1512 = vshrl.u32 %v1441, 16
        %v1514 = vrot.slane %v1512, 1
        %v1515 = vshll.u32 %v1441, 16
        %v1517 = vrot.slane %v1515, 2
        %v1518 = vor.u32 %v1514, %v1517
        %v1520 = vshrl.u32 %v1489, 16
        %v1522 = vrot.slane %v1520, 1
        %v1523 = vshll.u32 %v1489, 16
        %v1525 = vrot.slane %v1523, 2
        %v1526 = vor.u32 %v1522, %v1525
        %v1527 = vsel %vm521, %v1518, %v1526
        %v1529 = vshrl.u32 %v1442, 16
        %v1531 = vrot.slane %v1529, 1
        %v1532 = vshll.u32 %v1442, 16
        %v1534 = vrot.slane %v1532, 2
        %v1535 = vor.u32 %v1531, %v1534
        %v1537 = vshrl.u32 %v1490, 16
        %v1539 = vrot.slane %v1537, 1
        %v1540 = vshll.u32 %v1490, 16
        %v1542 = vrot.slane %v1540, 2
        %v1543 = vor.u32 %v1539, %v1542
        %v1544 = vsel %vm521, %v1535, %v1543
        %v1546 = vshrl.u32 %v1443, 16
        %v1548 = vrot.slane %v1546, 1
        %v1549 = vshll.u32 %v1443, 16
        %v1551 = vrot.slane %v1549, 2
        %v1552 = vor.u32 %v1548, %v1551
        %v1554 = vshrl.u32 %v1491, 16
        %v1556 = vrot.slane %v1554, 1
        %v1557 = vshll.u32 %v1491, 16
        %v1559 = vrot.slane %v1557, 2
        %v1560 = vor.u32 %v1556, %v1559
        %v1561 = vsel %vm521, %v1552, %v1560
        %v1563 = vshrl.u32 %v1444, 16
        %v1565 = vrot.slane %v1563, 1
        %v1566 = vshll.u32 %v1444, 16
        %v1568 = vrot.slane %v1566, 2
        %v1569 = vor.u32 %v1565, %v1568
        %v1571 = vshrl.u32 %v1492, 16
        %v1573 = vrot.slane %v1571, 1
        %v1574 = vshll.u32 %v1492, 16
        %v1576 = vrot.slane %v1574, 2
        %v1577 = vor.u32 %v1573, %v1576
        %v1578 = vsel %vm521, %v1569, %v1577
        %v1580 = vshrl.u32 %v1445, 16
        %v1582 = vrot.slane %v1580, 1
        %v1583 = vshll.u32 %v1445, 16
        %v1585 = vrot.slane %v1583, 2
        %v1586 = vor.u32 %v1582, %v1585
        %v1588 = vshrl.u32 %v1493, 16
        %v1590 = vrot.slane %v1588, 1
        %v1591 = vshll.u32 %v1493, 16
        %v1593 = vrot.slane %v1591, 2
        %v1594 = vor.u32 %v1590, %v1593
        %v1595 = vsel %vm521, %v1586, %v1594
        %1596 = vrot.lane.b32.xlu0 %v1510, 52
        %v1597 = vpop.permute.xlu0 %1596
        %1598 = vrot.lane.b32.xlu0 %v1527, 52
        %v1599 = vpop.permute.xlu0 %1598
        %1600 = vrot.lane.b32.xlu0 %v1544, 52
        %v1601 = vpop.permute.xlu0 %1600
        %1602 = vrot.lane.b32.xlu0 %v1561, 52
        %v1603 = vpop.permute.xlu0 %1602
        %1604 = vrot.lane.b32.xlu0 %v1578, 52
        %v1605 = vpop.permute.xlu0 %1604
        %1606 = vrot.lane.b32.xlu0 %v1595, 52
        %v1607 = vpop.permute.xlu0 %1606
        %vm1608 = vcmask 97280
        %v1610 = vsel %vm1608, %v345, %v443
        %v1612 = vsel %vm1608, %v346, %v445
        %v1614 = vsel %vm1608, %v347, %v447
        %v1616 = vsel %vm1608, %v348, %v449
        %v1618 = vsel %vm1608, %v349, %v451
        %v1620 = vsel %vm1608, %v350, %v453
        %vm1621 = vcmask 195584
        %v1623 = vsel %vm1621, %v1610, %v492
        %v1625 = vsel %vm1621, %v1612, %v494
        %v1627 = vsel %vm1621, %v1614, %v496
        %v1629 = vsel %vm1621, %v1616, %v498
        %v1631 = vsel %vm1621, %v1618, %v500
        %v1633 = vsel %vm1621, %v1620, %v502
        %vm1634 = vcmask 293888
        %v1636 = vsel %vm1634, %v1623, %v625
        %v1638 = vsel %vm1634, %v1625, %v627
        %v1640 = vsel %vm1634, %v1627, %v629
        %v1642 = vsel %vm1634, %v1629, %v631
        %v1644 = vsel %vm1634, %v1631, %v633
        %v1646 = vsel %vm1634, %v1633, %v635
        %vm1647 = vcmask 392192
        %v1649 = vsel %vm1647, %v1636, %v667
        %v1651 = vsel %vm1647, %v1638, %v669
        %v1653 = vsel %vm1647, %v1640, %v671
        %v1655 = vsel %vm1647, %v1642, %v673
        %v1657 = vsel %vm1647, %v1644, %v675
        %v1659 = vsel %vm1647, %v1646, %v677
        %vm1660 = vcmask 490496
        %v1662 = vsel %vm1660, %v1649, %v769
        %v1664 = vsel %vm1660, %v1651, %v771
        %v1666 = vsel %vm1660, %v1653, %v773
        %v1668 = vsel %vm1660, %v1655, %v775
        %v1670 = vsel %vm1660, %v1657, %v777
        %v1672 = vsel %vm1660, %v1659, %v779
        %vm1673 = vcmask 588800
        %v1675 = vsel %vm1673, %v1662, %v817
        %v1677 = vsel %vm1673, %v1664, %v819
        %v1679 = vsel %vm1673, %v1666, %v821
        %v1681 = vsel %vm1673, %v1668, %v823
        %v1683 = vsel %vm1673, %v1670, %v825
        %v1685 = vsel %vm1673, %v1672, %v827
        %vm1686 = vcmask 687104
        %v1688 = vsel %vm1686, %v1675, %v949
        %v1690 = vsel %vm1686, %v1677, %v951
        %v1692 = vsel %vm1686, %v1679, %v953
        %v1694 = vsel %vm1686, %v1681, %v955
        %v1696 = vsel %vm1686, %v1683, %v957
        %v1698 = vsel %vm1686, %v1685, %v959
        %vm1699 = vcmask 785408
        %v1701 = vsel %vm1699, %v1688, %v991
        %v1703 = vsel %vm1699, %v1690, %v993
        %v1705 = vsel %vm1699, %v1692, %v995
        %v1707 = vsel %vm1699, %v1694, %v997
        %v1709 = vsel %vm1699, %v1696, %v999
        %v1711 = vsel %vm1699, %v1698, %v1001
        %vm1712 = vcmask 883712
        %v1714 = vsel %vm1712, %v1701, %v1093
        %v1716 = vsel %vm1712, %v1703, %v1095
        %v1718 = vsel %vm1712, %v1705, %v1097
        %v1720 = vsel %vm1712, %v1707, %v1099
        %v1722 = vsel %vm1712, %v1709, %v1101
        %v1724 = vsel %vm1712, %v1711, %v1103
        %vm1725 = vcmask 982016
        %v1727 = vsel %vm1725, %v1714, %v1141
        %v1730 = vsel %vm1725, %v1716, %v1143
        %v1733 = vsel %vm1725, %v1718, %v1145
        %v1736 = vsel %vm1725, %v1720, %v1147
        %v1739 = vsel %vm1725, %v1722, %v1149
        %v1742 = vsel %vm1725, %v1724, %v1151
        %vm1744 = vcmask 31744
        %v1746 = vsel %vm1744, %v1141, %v1273
        %v1748 = vsel %vm1744, %v1143, %v1275
        %v1750 = vsel %vm1744, %v1145, %v1277
        %v1752 = vsel %vm1744, %v1147, %v1279
        %v1754 = vsel %vm1744, %v1149, %v1281
        %v1756 = vsel %vm1744, %v1151, %v1283
        %vm1757 = vcmask 130048
        %v1759 = vsel %vm1757, %v1746, %v1315
        %v1761 = vsel %vm1757, %v1748, %v1317
        %v1763 = vsel %vm1757, %v1750, %v1319
        %v1765 = vsel %vm1757, %v1752, %v1321
        %v1767 = vsel %vm1757, %v1754, %v1323
        %v1769 = vsel %vm1757, %v1756, %v1325
        %vm1770 = vcmask 228352
        %v1772 = vsel %vm1770, %v1759, %v1417
        %v1774 = vsel %vm1770, %v1761, %v1419
        %v1776 = vsel %vm1770, %v1763, %v1421
        %v1778 = vsel %vm1770, %v1765, %v1423
        %v1780 = vsel %vm1770, %v1767, %v1425
        %v1782 = vsel %vm1770, %v1769, %v1427
        %vm1783 = vcmask 326656
        %v1785 = vsel %vm1783, %v1772, %v1465
        %v1787 = vsel %vm1783, %v1774, %v1467
        %v1789 = vsel %vm1783, %v1776, %v1469
        %v1791 = vsel %vm1783, %v1778, %v1471
        %v1793 = vsel %vm1783, %v1780, %v1473
        %v1795 = vsel %vm1783, %v1782, %v1475
        %vm1796 = vcmask 424960
        %v1798 = vsel %vm1796, %v1785, %v1597
        %v1800 = vsel %vm1796, %v1787, %v1599
        %v1802 = vsel %vm1796, %v1789, %v1601
        %v1804 = vsel %vm1796, %v1791, %v1603
        %v1806 = vsel %vm1796, %v1793, %v1605
        %v1808 = vsel %vm1796, %v1795, %v1607
        %v1809 = vld [vmem:[%s1] sm:$0xf]
        %v1810 = vld [vmem:[%s1 + $0x4] sm:$0xf]
        %v1811 = vld [vmem:[%s1 + $0x8] sm:$0xf]
        %v1812 = vld [vmem:[%s1 + $0xc] sm:$0xf]
        %v1813 = vld [vmem:[%s1 + $0x10] sm:$0xf]
        %v1814 = vld [vmem:[%s1 + $0x14] sm:$0xf]
        %v1815 = vld [vmem:[%s1 + $0x18] sm:$0xf]
        %v1816 = vld [vmem:[%s1 + $0x1c] sm:$0xf]
        %v1817 = vld [vmem:[%s1 + $0x20] sm:$0xf]
        %v1818 = vld [vmem:[%s1 + $0x24] sm:$0xf]
        %v1819 = vld [vmem:[%s1 + $0x28] sm:$0xf]
        %v1820 = vld [vmem:[%s1 + $0x2c] sm:$0xf]
        %v1821 = vld [vmem:[%s1 + $0x30] sm:$0xf]
        %v1822 = vld [vmem:[%s1 + $0x34] sm:$0xf]
        %v1823 = vld [vmem:[%s1 + $0x38] sm:$0xf]
        %v1824 = vld [vmem:[%s1 + $0x3c] sm:$0xf]
        %v1825 = vld [vmem:[%s1 + $0x40] sm:$0xf]
        %v1826 = vld [vmem:[%s1 + $0x44] sm:$0xf]
        %v1827 = vld [vmem:[%s1 + $0x48] sm:$0xf]
        %v1828 = vld [vmem:[%s1 + $0x4c] sm:$0xf]
        %v1829 = vld [vmem:[%s1 + $0x50] sm:$0xf]
        %v1830 = vld [vmem:[%s1 + $0x54] sm:$0xf]
        %v1831 = vld [vmem:[%s1 + $0x58] sm:$0xf]
        %v1832 = vld [vmem:[%s1 + $0x5c] sm:$0xf]
        %v1833 = vld [vmem:[%s2] sm:$0x1]
        %v1835 = vlaneseq
        %v1836 = vshrl.u32 %v1835, 7
        %v1837 = vsub.s32 0, %v1836
        %v1838 = vrot.slane %v1833, %v1837
        %v1864 = vunpack.c.l.b16 %v1809
        %v1865 = vunpack.c.l.b16 %v1810
        %v1866 = vunpack.c.l.b16 %v1811
        %v1867 = vunpack.c.l.b16 %v1812
        %v1868 = vunpack.c.l.b16 %v1813
        %v1869 = vunpack.c.l.b16 %v1814
        %v1870 = vunpack.c.l.b16 %v1815
        %v1871 = vunpack.c.l.b16 %v1816
        %v1872 = vunpack.c.l.b16 %v1817
        %v1873 = vunpack.c.l.b16 %v1818
        %v1874 = vunpack.c.l.b16 %v1819
        %v1875 = vunpack.c.l.b16 %v1820
        %v1876 = vunpack.c.l.b16 %v1821
        %v1877 = vunpack.c.l.b16 %v1822
        %v1878 = vunpack.c.l.b16 %v1823
        %v1879 = vunpack.c.l.b16 %v1824
        %v1880 = vunpack.c.l.b16 %v1825
        %v1881 = vunpack.c.l.b16 %v1826
        %v1882 = vunpack.c.l.b16 %v1827
        %v1883 = vunpack.c.l.b16 %v1828
        %v1884 = vunpack.c.l.b16 %v1829
        %v1885 = vunpack.c.l.b16 %v1830
        %v1886 = vunpack.c.l.b16 %v1831
        %v1887 = vunpack.c.l.b16 %v1832
        %v1888 = vpack.c.b16 %v1865, %v1864
        %v1889 = vpack.c.b16 %v1867, %v1866
        %v1890 = vpack.c.b16 %v1869, %v1868
        %v1891 = vpack.c.b16 %v1871, %v1870
        %v1892 = vpack.c.b16 %v1873, %v1872
        %v1893 = vpack.c.b16 %v1875, %v1874
        %v1894 = vpack.c.b16 %v1877, %v1876
        %v1895 = vpack.c.b16 %v1879, %v1878
        %v1896 = vpack.c.b16 %v1881, %v1880
        %v1897 = vpack.c.b16 %v1883, %v1882
        %v1898 = vpack.c.b16 %v1885, %v1884
        %v1899 = vpack.c.b16 %v1887, %v1886
        %vm1912 = vcmask 523264
        %v1913 = vsel %vm1912, %v1798, 0
        %v1915 = vsel %vm1912, %v1800, 0
        %v1917 = vsel %vm1912, %v1802, 0
        %v1919 = vsel %vm1912, %v1804, 0
        %v1921 = vsel %vm1912, %v1806, 0
        %v1923 = vsel %vm1912, %v1808, 0
        %1925 = vmatprep.subr.bf16.mxu0 0
        %1926 = vmatpush1.bf16.msra.mxu0 %v1888
        %1927 = vmatprep.subr.bf16.mxu0 0
        %1928 = vmatpush1.bf16.msra.mxu0 %v1889
        %1929 = vmatprep.subr.bf16.mxu0 0
        %1930 = vmatpush1.bf16.msra.mxu0 %v1890
        %1931 = vmatprep.subr.bf16.mxu0 0
        %1932 = vmatpush1.bf16.msra.mxu0 %v1891
        %1933 = vmatprep.subr.bf16.mxu0 0
        %1934 = vmatpush1.bf16.msra.mxu0 %v1892
        %1935 = vmatprep.subr.bf16.mxu0 0
        %1936 = vmatpush1.bf16.msra.mxu0 %v1893
        %1937 = vmatprep.subr.bf16.mxu0 0
        %1938 = vmatpush1.bf16.msra.mxu0 %v1894
        %1939 = vmatprep.subr.bf16.mxu0 0
        %1940 = vmatpush1.bf16.msra.mxu0 %v1895
        %1941 = vmatprep.subr.bf16.mxu0 0
        %1942 = vmatpush1.bf16.msra.mxu0 %v1896
        %1943 = vmatprep.subr.bf16.mxu0 0
        %1944 = vmatpush1.bf16.msra.mxu0 %v1897
        %1945 = vmatprep.subr.bf16.mxu0 0
        %1946 = vmatpush1.bf16.msra.mxu0 %v1898
        %1947 = vmatprep.subr.bf16.mxu0 0
        %1948 = vmatpush1.bf16.msra.mxu0 %v1899
        %1949 = vmatprep.subr.bf16.mxu0 0
        %1950 = vmatpush1.bf16.msra.mxu0 0
        %1951 = vmatprep.subr.bf16.mxu0 0
        %1952 = vmatpush1.bf16.msra.mxu0 0
        %1953 = vmatprep.subr.bf16.mxu0 0
        %1954 = vmatpush1.bf16.msra.mxu0 0
        %1955 = vmatprep.subr.bf16.mxu0 0
        %1956 = vmatpush1.bf16.msra.mxu0 0
        %1957 = vmatprep.mubr.bf16.mxu0 %v1913
        %1958 = vmatmul.mubr.bf16.gmra.mrb[0].mxu0 %v1727
        %v1959 = vpop.f32.mrb[0].mxu0
        %v1960 = vadd.f32 %v1838, %v1959
        %v1961 = vpop.f32.mrb[0].mxu0
        %v1962 = vpop.f32.mrb[0].mxu0
        %v1963 = vadd.f32 %v1838, %v1962
        %v1964 = vpop.f32.mrb[0].mxu0
        %1965 = vmatprep.mubr.bf16.mxu0 %v1915
        %1966 = vmatmul.mubr.bf16.gmra.mrb[0].mxu0 %v1730
        %v1967 = vpop.f32.mrb[0].mxu0
        %v1968 = vadd.f32 %v1838, %v1967
        %v1969 = vpop.f32.mrb[0].mxu0
        %v1970 = vpop.f32.mrb[0].mxu0
        %v1971 = vadd.f32 %v1838, %v1970
        %v1972 = vpop.f32.mrb[0].mxu0
        %1973 = vmatprep.mubr.bf16.mxu0 %v1917
        %1974 = vmatmul.mubr.bf16.gmra.mrb[0].mxu0 %v1733
        %v1975 = vpop.f32.mrb[0].mxu0
        %v1976 = vadd.f32 %v1838, %v1975
        %v1977 = vpop.f32.mrb[0].mxu0
        %v1978 = vpop.f32.mrb[0].mxu0
        %v1979 = vadd.f32 %v1838, %v1978
        %v1980 = vpop.f32.mrb[0].mxu0
        %1981 = vmatprep.mubr.bf16.mxu0 %v1919
        %1982 = vmatmul.mubr.bf16.gmra.mrb[0].mxu0 %v1736
        %v1983 = vpop.f32.mrb[0].mxu0
        %v1984 = vadd.f32 %v1838, %v1983
        %v1985 = vpop.f32.mrb[0].mxu0
        %v1986 = vpop.f32.mrb[0].mxu0
        %v1987 = vadd.f32 %v1838, %v1986
        %v1988 = vpop.f32.mrb[0].mxu0
        %1989 = vmatprep.mubr.bf16.mxu0 %v1921
        %1990 = vmatmul.mubr.bf16.gmra.mrb[0].mxu0 %v1739
        %v1991 = vpop.f32.mrb[0].mxu0
        %v1992 = vadd.f32 %v1838, %v1991
        %v1993 = vpop.f32.mrb[0].mxu0
        %v1994 = vpop.f32.mrb[0].mxu0
        %v1995 = vadd.f32 %v1838, %v1994
        %v1996 = vpop.f32.mrb[0].mxu0
        %1997 = vmatprep.mubr.bf16.mxu0 %v1923
        %1998 = vmatmul.mubr.bf16.gmra.mrb[0].mxu0 %v1742
        %v1999 = vpop.f32.mrb[0].mxu0
        %v2000 = vadd.f32 %v1838, %v1999
        %v2001 = vpop.f32.mrb[0].mxu0
        %v2002 = vpop.f32.mrb[0].mxu0
        %v2003 = vadd.f32 %v1838, %v2002
        %v2004 = vpop.f32.mrb[0].mxu0
        %2005 = vdwg.mxu0
        %v2006 = vmax.f32 %v1960, 0.0
        %v2007 = vmax.f32 %v1963, 0.0
        %v2008 = vmax.f32 %v1968, 0.0
        %v2009 = vmax.f32 %v1971, 0.0
        %v2010 = vmax.f32 %v1976, 0.0
        %v2011 = vmax.f32 %v1979, 0.0
        %v2012 = vmax.f32 %v1984, 0.0
        %v2013 = vmax.f32 %v1987, 0.0
        %v2014 = vmax.f32 %v1992, 0.0
        %v2015 = vmax.f32 %v1995, 0.0
        %v2016 = vmax.f32 %v2000, 0.0
        %v2017 = vmax.f32 %v2003, 0.0
        %s2018 = ssub.s32 %s185, 1
        %v2019 = vstv %s2018
        %v2020 = vadd.s32 %v2019, 1
        %v2021 = vadd.s32 %v2019, 2
        %v2022 = vadd.s32 %v2019, 3
        %v2023 = vadd.s32 %v2019, 4
        %v2024 = vadd.s32 %v2019, 5
        %v2025 = vlaneseq
        %v2026 = vshrl.u32 %v2025, 7
        %v2027 = vadd.s32 %v2026, 8
        %v2028 = vsub.s32 %v2026, 1
        %v2029 = vsub.s32 %v2027, 1
        %vm2030 = vcmp.ge.s32.totalorder %v2019, 0
        %vm2031 = vcmp.ge.s32.totalorder %v2020, 0
        %vm2032 = vcmp.ge.s32.totalorder %v2021, 0
        %vm2033 = vcmp.ge.s32.totalorder %v2022, 0
        %vm2034 = vcmp.ge.s32.totalorder %v2023, 0
        %vm2035 = vcmp.ge.s32.totalorder %v2024, 0
        %vm2036 = vcmp.lt.s32.totalorder %v2019, 8
        %vm2037 = vcmp.lt.s32.totalorder %v2020, 8
        %vm2038 = vcmp.lt.s32.totalorder %v2021, 8
        %vm2039 = vcmp.lt.s32.totalorder %v2022, 8
        %vm2040 = vcmp.lt.s32.totalorder %v2023, 8
        %vm2041 = vcmp.lt.s32.totalorder %v2024, 8
        %vm2042 = vmand %vm2030, %vm2036
        %vm2043 = vmand %vm2031, %vm2037
        %vm2044 = vmand %vm2032, %vm2038
        %vm2045 = vmand %vm2033, %vm2039
        %vm2046 = vmand %vm2034, %vm2040
        %vm2047 = vmand %vm2035, %vm2041
        %vm2048 = vcmp.ge.s32.totalorder %v2028, 0
        %vm2049 = vcmp.ge.s32.totalorder %v2029, 0
        %v2050 = vsel %vm2042, 1, 0
        %v2051 = vsel %vm2043, 1, 0
        %v2052 = vsel %vm2044, 1, 0
        %v2053 = vsel %vm2045, 1, 0
        %v2054 = vsel %vm2046, 1, 0
        %v2055 = vsel %vm2047, 1, 0
        %vm2056 = vcmp.eq.s32.totalorder %v2050, 1
        %vm2057 = vcmp.eq.s32.totalorder %v2051, 1
        %vm2058 = vcmp.eq.s32.totalorder %v2052, 1
        %vm2059 = vcmp.eq.s32.totalorder %v2053, 1
        %vm2060 = vcmp.eq.s32.totalorder %v2054, 1
        %vm2061 = vcmp.eq.s32.totalorder %v2055, 1
        %v2062 = vsel %vm2048, 1, 0
        %v2063 = vsel %vm2049, 1, 0
        %vm2064 = vcmp.eq.s32.totalorder %v2062, 1
        %vm2065 = vcmp.eq.s32.totalorder %v2063, 1
        %vm2066 = vmand %vm2056, %vm2064
        %vm2067 = vmand %vm2056, %vm2065
        %vm2068 = vmand %vm2057, %vm2064
        %vm2069 = vmand %vm2057, %vm2065
        %vm2070 = vmand %vm2058, %vm2064
        %vm2071 = vmand %vm2058, %vm2065
        %vm2072 = vmand %vm2059, %vm2064
        %vm2073 = vmand %vm2059, %vm2065
        %vm2074 = vmand %vm2060, %vm2064
        %vm2075 = vmand %vm2060, %vm2065
        %vm2076 = vmand %vm2061, %vm2064
        %vm2077 = vmand %vm2061, %vm2065
        %vm2078 = vcmp.lt.s32.totalorder %v2028, 8
        %vm2079 = vcmp.lt.s32.totalorder %v2029, 8
        %v2080 = vsel %vm2078, 1, 0
        %v2081 = vsel %vm2079, 1, 0
        %vm2082 = vcmp.eq.s32.totalorder %v2080, 1
        %vm2083 = vcmp.eq.s32.totalorder %v2081, 1
        %vm2084 = vmand %vm2066, %vm2082
        %vm2085 = vmand %vm2067, %vm2083
        %vm2086 = vmand %vm2068, %vm2082
        %vm2087 = vmand %vm2069, %vm2083
        %vm2088 = vmand %vm2070, %vm2082
        %vm2089 = vmand %vm2071, %vm2083
        %vm2090 = vmand %vm2072, %vm2082
        %vm2091 = vmand %vm2073, %vm2083
        %vm2092 = vmand %vm2074, %vm2082
        %vm2093 = vmand %vm2075, %vm2083
        %vm2094 = vmand %vm2076, %vm2082
        %vm2095 = vmand %vm2077, %vm2083
        %v2096 = vsel %vm2084, 1, 0
        %v2097 = vsel %vm2085, 1, 0
        %v2098 = vsel %vm2086, 1, 0
        %v2099 = vsel %vm2087, 1, 0
        %v2100 = vsel %vm2088, 1, 0
        %v2101 = vsel %vm2089, 1, 0
        %v2102 = vsel %vm2090, 1, 0
        %v2103 = vsel %vm2091, 1, 0
        %v2104 = vsel %vm2092, 1, 0
        %v2105 = vsel %vm2093, 1, 0
        %v2106 = vsel %vm2094, 1, 0
        %v2107 = vsel %vm2095, 1, 0
        %vm2108 = vcmp.eq.s32.totalorder %v2096, 1
        %vm2109 = vcmp.eq.s32.totalorder %v2097, 1
        %vm2110 = vcmp.eq.s32.totalorder %v2098, 1
        %vm2111 = vcmp.eq.s32.totalorder %v2099, 1
        %vm2112 = vcmp.eq.s32.totalorder %v2100, 1
        %vm2113 = vcmp.eq.s32.totalorder %v2101, 1
        %vm2114 = vcmp.eq.s32.totalorder %v2102, 1
        %vm2115 = vcmp.eq.s32.totalorder %v2103, 1
        %vm2116 = vcmp.eq.s32.totalorder %v2104, 1
        %vm2117 = vcmp.eq.s32.totalorder %v2105, 1
        %vm2118 = vcmp.eq.s32.totalorder %v2106, 1
        %vm2119 = vcmp.eq.s32.totalorder %v2107, 1
        %v2120 = vsel %vm2108, %v2006, 0.0
        %v2121 = vsel %vm2109, %v2007, 0.0
        %v2122 = vsel %vm2110, %v2008, 0.0
        %v2123 = vsel %vm2111, %v2009, 0.0
        %v2124 = vsel %vm2112, %v2010, 0.0
        %v2125 = vsel %vm2113, %v2011, 0.0
        %v2126 = vsel %vm2114, %v2012, 0.0
        %v2127 = vsel %vm2115, %v2013, 0.0
        %v2128 = vsel %vm2116, %v2014, 0.0
        %v2129 = vsel %vm2117, %v2015, 0.0
        %v2130 = vsel %vm2118, %v2016, 0.0
        %v2131 = vsel %vm2119, %v2017, 0.0
        %2132 = vst.msk [vmem:[#allocation2] sm:$0xff] %vm1912, %v2120
        %2133 = vst.msk [vmem:[#allocation2 + $0x8] sm:$0xff] %vm1912, %v2121
        %2134 = vst.msk [vmem:[#allocation2 + $0x10] sm:$0xff] %vm1912, %v2122
        %2135 = vst.msk [vmem:[#allocation2 + $0x18] sm:$0xff] %vm1912, %v2123
        %2136 = vst.msk [vmem:[#allocation2 + $0x20] sm:$0xff] %vm1912, %v2124
        %2137 = vst.msk [vmem:[#allocation2 + $0x28] sm:$0xff] %vm1912, %v2125
        %2138 = vst.msk [vmem:[#allocation2 + $0x30] sm:$0xff] %vm1912, %v2126
        %2139 = vst.msk [vmem:[#allocation2 + $0x38] sm:$0xff] %vm1912, %v2127
        %2140 = vst.msk [vmem:[#allocation2 + $0x40] sm:$0xff] %vm1912, %v2128
        %2141 = vst.msk [vmem:[#allocation2 + $0x48] sm:$0xff] %vm1912, %v2129
        %2142 = vst.msk [vmem:[#allocation2 + $0x50] sm:$0xff] %vm1912, %v2130
        %2143 = vst.msk [vmem:[#allocation2 + $0x58] sm:$0xff] %vm1912, %v2131
        %v2144 = vld [vmem:[#allocation2] ss:$2 sm:$0xf]
        %s2145 = scalar_lea.vmem [#allocation2], 16
        %v2146 = vld [vmem:[%s2145] ss:$2 sm:$0xf]
        %s2147 = scalar_lea.vmem [#allocation2], 32
        %v2148 = vld [vmem:[%s2147] ss:$2 sm:$0xf]
        %s2149 = scalar_lea.vmem [#allocation2], 48
        %v2150 = vld [vmem:[%s2149] ss:$2 sm:$0xf]
        %s2151 = scalar_lea.vmem [#allocation2], 64
        %v2152 = vld [vmem:[%s2151] ss:$2 sm:$0xf]
        %s2153 = scalar_lea.vmem [#allocation2], 1
        %v2154 = vld [vmem:[%s2153] ss:$2 sm:$0xf]
        %s2155 = scalar_lea.vmem [#allocation2], 17
        %v2156 = vld [vmem:[%s2155] ss:$2 sm:$0xf]
        %s2157 = scalar_lea.vmem [#allocation2], 33
        %v2158 = vld [vmem:[%s2157] ss:$2 sm:$0xf]
        %s2159 = scalar_lea.vmem [#allocation2], 49
        %v2160 = vld [vmem:[%s2159] ss:$2 sm:$0xf]
        %s2161 = scalar_lea.vmem [#allocation2], 65
        %v2162 = vld [vmem:[%s2161] ss:$2 sm:$0xf]
        %s2163 = scalar_lea.vmem [#allocation2], 2
        %v2164 = vld [vmem:[%s2163] ss:$2 sm:$0xf]
        %s2165 = scalar_lea.vmem [#allocation2], 18
        %v2166 = vld [vmem:[%s2165] ss:$2 sm:$0xf]
        %s2167 = scalar_lea.vmem [#allocation2], 34
        %v2168 = vld [vmem:[%s2167] ss:$2 sm:$0xf]
        %s2169 = scalar_lea.vmem [#allocation2], 50
        %v2170 = vld [vmem:[%s2169] ss:$2 sm:$0xf]
        %s2171 = scalar_lea.vmem [#allocation2], 66
        %v2172 = vld [vmem:[%s2171] ss:$2 sm:$0xf]
        %v2173 = vmax.f32 %v2144, %v2154
        %v2174 = vmax.f32 %v2146, %v2156
        %v2175 = vmax.f32 %v2148, %v2158
        %v2176 = vmax.f32 %v2150, %v2160
        %v2177 = vmax.f32 %v2152, %v2162
        %v2178 = vmax.f32 %v2173, %v2164
        %v2179 = vmax.f32 %v2174, %v2166
        %v2180 = vmax.f32 %v2175, %v2168
        %v2181 = vmax.f32 %v2176, %v2170
        %v2182 = vmax.f32 %v2177, %v2172
        %v2183 = vmax.f32 %v2178, %v2179
        %v2184 = vmax.f32 %v2180, %v2181
        %v2185 = vmax.f32 %v2183, %v2180
        %v2186 = vmax.f32 %v2184, %v2182
        %vm2187 = vcmask 519168
        %2188 = vst.msk [vmem:[%s177] sm:$0xf] %vm2187, %v2185
        %2189 = vst.msk [vmem:[%s177 + $0x4] sm:$0xf] %vm2187, %v2186
        %s2190 = sand.u32 %s107, 1
        %s2191 = scalar_lea.sflag [#allocation4], %s2190
        %s2192 = sand.u32 %s107, 1
        %s2193 = smul.addr %s2192, 8
        %s2194 = scalar_lea.vmem [#allocation3], %s2193
        // Predicated region
        $region33: #{basic_stem_forward.1} parent=31 // pred_check
          %p2195 = pneg %p117
        $region34: #{basic_stem_forward.1} parent=31 // pred_check_branch
          %2197 = sbr.rel (%p2195) target = $region36
        $region35: #{basic_stem_forward.1} parent=31 // pred_region
          %s2198 = smul.u32 2, %s22
          %s2200 = ssub.s32 128, 128
          %2201 = vsyncadd %s2191, %s2200
          %s2202 = smul.addr %s21, 4
          %s2203 = sadd.s32 %s2198, %s2202
          %s2204 = smul.addr %s2203, 64
          %s2205 = scalar_lea.hbm %s3, %s2204
          %s2206 = sshll.u32 %s2194, 4
          %s2207 = int_to_ptr.vmem [resolvable:$true] %s2206
          %2212 = dma.vmem_to_hbm [thread:$0]  %s2207, 128, %s2205, %s2191, 64, 64, 4
        $region36: #{basic_stem_forward.1} parent=31 // pred_fallthru
          _
      $region32: #{basic_stem_forward.1} parent=5 // pred_fallthru
        _
      %p2213 = scmp.le.s32.totalorder 2, %s12
      // Predicated region
      $region37: #{basic_stem_forward.1} parent=5 // pred_check
        %p2214 = pneg %p2213
      $region38: #{basic_stem_forward.1} parent=5 // pred_check_branch
        %2216 = sbr.rel (%p2214) target = $region40
      $region39: #{basic_stem_forward.1} parent=5 // pred_region
        %s2217 = ssub.s32 %s12, 2
        // Predicated region
        $region41: #{basic_stem_forward.1} parent=39 // pred_check
          %p2218 = pneg %p123
        $region42: #{basic_stem_forward.1} parent=39 // pred_check_branch
          %2220 = sbr.rel (%p2218) target = $region44
        $region43: #{basic_stem_forward.1} parent=39 // pred_region
          %s2221 = sand.u32 %s108, 1
          %s2222 = scalar_lea.sflag [#allocation4], %s2221
          %s2223 = sand.u32 %s108, 1
          %s2224 = smul.addr %s2223, 8
          %s2225 = scalar_lea.vmem [#allocation3], %s2224
          %2226 = dma.done %s2222, 128
        $region44: #{basic_stem_forward.1} parent=39 // pred_fallthru
          _
      $region40: #{basic_stem_forward.1} parent=5 // pred_fallthru
        _
    $region6: #{basic_stem_forward.1} parent=1 // loop_footer
      %s16 = sadd.s32 1, %s12
    $region7: #{basic_stem_forward.1} parent=1 // loop_footer_branch
      %11 = sbr.rel target = $region3
    $region8: #{basic_stem_forward.1} parent=1 // loop_exit
      _
    %2227 = vsyncpa [#allocation4], 1
    %s2228 = scalar_lea.sflag [#allocation4], 1
    %2229 = vsyncpa %s2228, 1

</llo_original>
